<compile_context>
chip_gen: v7x
topology: tpu7x:2x2x1
jax: 0.10.0
libtpu: 0.0.40
codegen_flags: <defaults>
</compile_context>

<pallas_src>
import functools

import numpy as np

import jax
import jax.numpy as jnp
from jax.experimental import pallas as pl
from jax.experimental.pallas import tpu as pltpu


def _make_tap_masks(h, w):
    """(9, h*w) 0/1 masks: tap (kh, kw) is valid where the shifted pixel is in-bounds."""
    m = np.zeros((9, h, w), np.float32)
    for kh in range(3):
        for kw in range(3):
            dh, dw = kh - 1, kw - 1
            y0, y1 = max(0, -dh), min(h, h - dh)
            x0, x1 = max(0, -dw), min(w, w - dw)
            m[kh * 3 + kw, y0:y1, x0:x1] = 1.0
    return jnp.asarray(m.reshape(9, h * w))


def _conv_block_kernel(x_ref, masks_ref,
                       w0_ref, b0_ref, a0_ref,
                       w1_ref, b1_ref, a1_ref,
                       w2_ref, b2_ref, a2_ref,
                       o_ref, *, h, w, cin, cout):
    """One batch element: three chained 3x3 convs + channelwise PReLU.

    Activations are (C, H*W): channels on sublanes, flat spatial on lanes
    (lane-dense).  Shifted 3x3 windows come from pltpu.roll along the flat
    H*W axis plus border masks, so there is no padded scratch, no zero fills
    and no (h, w, c) <-> (h*w, c) relayouts.
    """
    hw = h * w
    tap_masks = [masks_ref[pl.ds(t, 1), :] for t in range(9)]       # each (1, hw)

    def conv3x3_prelu(xf, c_in, w_ref, b_ref, a_ref):
        # Build the 9 shifted + border-masked copies of the input.
        parts = []
        for kh in range(3):
            for kw in range(3):
                tap = kh * 3 + kw
                dh, dw = kh - 1, kw - 1
                s = (-(dh * w + dw)) % hw                           # static int
                sh = xf if s == 0 else pltpu.roll(xf, shift=s, axis=1)
                parts.append(sh * tap_masks[tap])                   # (c_in, hw)

        if c_in % 8 == 0:
            # Sublane-aligned im2col: one MXU matmul with K = 9*c_in.
            patches = jnp.concatenate(parts, axis=0)                # (9*c_in, hw)
            acc = jnp.dot(w_ref[...], patches,                      # (cout, 9*c_in) @
                          preferred_element_type=jnp.float32)       #   (9*c_in, hw)
        else:
            # c_in not sublane-aligned (e.g. cin=4): 9 small per-tap dots.
            acc = jnp.zeros((cout, hw), jnp.float32)
            for tap in range(9):
                acc = acc + jnp.dot(w_ref[tap], parts[tap],         # (cout, c_in) @
                                    preferred_element_type=jnp.float32)
        acc = acc + b_ref[...]                                      # (cout, 1) bias
        alpha = a_ref[...]                                          # (cout, 1) slope
        return jnp.where(acc > 0, acc, alpha * acc)                 # channelwise PReLU

    x0 = x_ref[0].astype(jnp.float32)                               # (cin, hw)
    x1 = conv3x3_prelu(x0, cin, w0_ref, b0_ref, a0_ref)
    o_ref[0, 0:cout, :] = x1.astype(o_ref.dtype)                    # store immediately:
    x2 = conv3x3_prelu(x1, cout, w1_ref, b1_ref, a1_ref)            # no concat, short
    o_ref[0, cout:2 * cout, :] = x2.astype(o_ref.dtype)             # live ranges
    x3 = conv3x3_prelu(x2, cout, w2_ref, b2_ref, a2_ref)
    o_ref[0, 2 * cout:3 * cout, :] = x3.astype(o_ref.dtype)


def _prep_weight(w_hwio):
    """HWIO (3,3,ci,co) -> matmul layout used by the kernel."""
    ci, co = w_hwio.shape[2], w_hwio.shape[3]
    if ci % 8 == 0:
        # im2col layout: rows = cout, cols ordered [tap-major, ci-minor].
        return jnp.transpose(w_hwio, (3, 0, 1, 2)).reshape(co, 9 * ci)
    # per-tap layout: (9, cout, ci)
    return jnp.transpose(w_hwio, (0, 1, 3, 2)).reshape(9, co, ci)


def conv_block_forward(x_nchw, params):
    """PyTorch-equivalent ConvBlock forward. x_nchw: (N, Cin, H, W) float32.

    NOTE: conv weights are expected in HWIO; permute PyTorch OIHW via (2, 3, 1, 0).
    """
    (w0, b0, a0), (w1, b1, a1), (w2, b2, a2) = params
    n, cin, h, w = x_nchw.shape
    cout = w0.shape[-1]
    hw = h * w

    # Lane-dense layout with zero HBM transposes: NCHW -> (N, C, H*W) is a pure
    # reshape, and so is the (N, 3*cout, H*W) -> NCHW output below.
    x_flat = x_nchw.reshape(n, cin, hw)
    masks = _make_tap_masks(h, w)
    col = lambda v: v.reshape(-1, 1)            # (C,) -> (C, 1) lane-broadcast vector

    def full_spec(arr):
        nd = arr.ndim
        return pl.BlockSpec(arr.shape, lambda i: (0,) * nd)

    inputs = (x_flat, masks,
              _prep_weight(w0), col(b0), col(a0),
              _prep_weight(w1), col(b1), col(a1),
              _prep_weight(w2), col(b2), col(a2))

    in_specs = [pl.BlockSpec((1, cin, hw), lambda i: (i, 0, 0))]
    in_specs += [full_spec(a) for a in inputs[1:]]

    kernel = functools.partial(_conv_block_kernel, h=h, w=w, cin=cin, cout=cout)

    out_flat = pl.pallas_call(
        kernel,
        out_shape=jax.ShapeDtypeStruct((n, 3 * cout, hw), x_nchw.dtype),
        grid_spec=pltpu.PrefetchScalarGridSpec(
            num_scalar_prefetch=0,
            grid=(n,),                          # one batch element per grid step
            in_specs=in_specs,
            out_specs=pl.BlockSpec((1, 3 * cout, hw), lambda i: (i, 0, 0)),
        ),
        compiler_params=pltpu.CompilerParams(
            dimension_semantics=("parallel",),  # pipeline + megacore sharding
        ),
    )(*inputs)

    return out_flat.reshape(n, 3 * cout, h, w)


class ConvBlockPallas:
    """Mirror of SNWBPE.ConvBlock: 3x [Conv2d 3x3 s1 p1 + PReLU(C)], concat dim=1."""

    def __init__(self, in_channels, out_channels, params,
                 num_conv=1, num_stage=1, level=2):
        self.in_channels, self.out_channels = in_channels, out_channels
        self.num_conv, self.num_stage, self.level = num_conv, num_stage, level
        self.params = params   # ((w0,b0,a0),(w1,b1,a1),(w2,b2,a2)), weights in HWIO

    def __call__(self, x):
        return conv_block_forward(x, self.params)


def _ref_conv_block(x_nchw, params):
    """Pure-JAX reference (XLA conv) matching PyTorch semantics."""
    (w0, b0, a0), (w1, b1, a1), (w2, b2, a2) = params

    def conv(x, wgt, b):
        y = jax.lax.conv_general_dilated(
            x, wgt, window_strides=(1, 1), padding=((1, 1), (1, 1)),
            dimension_numbers=("NCHW", "HWIO", "NCHW"))
        return y + b[None, :, None, None]

    def prelu(x, a):
        return jnp.where(x > 0, x, a[None, :, None, None] * x)

    x1 = prelu(conv(x_nchw, w0, b0), a0)
    x2 = prelu(conv(x1, w1, b1), a1)
    x3 = prelu(conv(x2, w2, b2), a2)
    return jnp.concatenate([x1, x2, x3], axis=1)


if __name__ == "__main__":
    N, CIN, COUT, H, W = 2, 4, 8, 16, 16
    key = jax.random.PRNGKey(0)
    ks = jax.random.split(key, 10)
    x = jax.random.normal(ks[0], (N, CIN, H, W), dtype=jnp.float32)

    def make_layer(kw_, kb_, ka_, c_in):
        wgt = 0.2 * jax.random.normal(kw_, (3, 3, c_in, COUT), jnp.float32)  # HWIO
        b = 0.1 * jax.random.normal(kb_, (COUT,), jnp.float32)
        a = jax.random.uniform(ka_, (COUT,), jnp.float32, 0.05, 0.5)         # PReLU slopes
        return wgt, b, a

    params = (make_layer(ks[1], ks[2], ks[3], CIN),
              make_layer(ks[4], ks[5], ks[6], COUT),
              make_layer(ks[7], ks[8], ks[9], COUT))

    block = ConvBlockPallas(CIN, COUT, params, num_conv=1, num_stage=1, level=2)
    out = jax.block_until_ready(block(x))

    ref = _ref_conv_block(x, params)
    assert out.shape == ref.shape == (N, 3 * COUT, H, W)
    assert jnp.allclose(out, ref, atol=1e-4, rtol=1e-4), "ConvBlock mismatch vs reference"

    print("KERNEL_OK")
</pallas_src>

<mosaic_0001>
module attributes {stable_mosaic.version = 11 : i64} {
  func.func @_conv_block_kernel(%arg0: i32, %arg1: memref<1x4x256xf32, #tpu.memory_space<vmem>>, %arg2: memref<9x256xf32, #tpu.memory_space<vmem>>, %arg3: memref<9x8x4xf32, #tpu.memory_space<vmem>>, %arg4: memref<8x1xf32, #tpu.memory_space<vmem>>, %arg5: memref<8x1xf32, #tpu.memory_space<vmem>>, %arg6: memref<8x72xf32, #tpu.memory_space<vmem>>, %arg7: memref<8x1xf32, #tpu.memory_space<vmem>>, %arg8: memref<8x1xf32, #tpu.memory_space<vmem>>, %arg9: memref<8x72xf32, #tpu.memory_space<vmem>>, %arg10: memref<8x1xf32, #tpu.memory_space<vmem>>, %arg11: memref<8x1xf32, #tpu.memory_space<vmem>>, %arg12: memref<1x24x256xf32, #tpu.memory_space<vmem>>) attributes {dimension_semantics = [#tpu.dimension_semantics<parallel>], iteration_bounds = array<i64: 2>, scalar_prefetch = 0 : i64, scratch_operands = 0 : i64, tpu.core_type = #tpu.core_type<tc>, window_params = [{transform_indices = @transform_0, window_bounds = array<i64: 1, 4, 256>}, {pipeline_mode = #tpu.pipeline_mode<synchronous>, transform_indices = @transform_1, window_bounds = array<i64: 9, 256>}, {pipeline_mode = #tpu.pipeline_mode<synchronous>, transform_indices = @transform_2, window_bounds = array<i64: 9, 8, 4>}, {pipeline_mode = #tpu.pipeline_mode<synchronous>, transform_indices = @transform_3, window_bounds = array<i64: 8, 1>}, {pipeline_mode = #tpu.pipeline_mode<synchronous>, transform_indices = @transform_4, window_bounds = array<i64: 8, 1>}, {pipeline_mode = #tpu.pipeline_mode<synchronous>, transform_indices = @transform_5, window_bounds = array<i64: 8, 72>}, {pipeline_mode = #tpu.pipeline_mode<synchronous>, transform_indices = @transform_6, window_bounds = array<i64: 8, 1>}, {pipeline_mode = #tpu.pipeline_mode<synchronous>, transform_indices = @transform_7, window_bounds = array<i64: 8, 1>}, {pipeline_mode = #tpu.pipeline_mode<synchronous>, transform_indices = @transform_8, window_bounds = array<i64: 8, 72>}, {pipeline_mode = #tpu.pipeline_mode<synchronous>, transform_indices = @transform_9, window_bounds = array<i64: 8, 1>}, {pipeline_mode = #tpu.pipeline_mode<synchronous>, transform_indices = @transform_10, window_bounds = array<i64: 8, 1>}, {transform_indices = @transform_11, window_bounds = array<i64: 1, 24, 256>}]} {
    %c0 = arith.constant 0 : index
    %c0_0 = arith.constant 0 : index
    %0 = vector.load %arg2[%c0, %c0_0] : memref<9x256xf32, #tpu.memory_space<vmem>>, vector<1x256xf32>
    %c1 = arith.constant 1 : index
    %c0_1 = arith.constant 0 : index
    %1 = vector.load %arg2[%c1, %c0_1] : memref<9x256xf32, #tpu.memory_space<vmem>>, vector<1x256xf32>
    %c2 = arith.constant 2 : index
    %c0_2 = arith.constant 0 : index
    %2 = vector.load %arg2[%c2, %c0_2] : memref<9x256xf32, #tpu.memory_space<vmem>>, vector<1x256xf32>
    %c3 = arith.constant 3 : index
    %c0_3 = arith.constant 0 : index
    %3 = vector.load %arg2[%c3, %c0_3] : memref<9x256xf32, #tpu.memory_space<vmem>>, vector<1x256xf32>
    %c4 = arith.constant 4 : index
    %c0_4 = arith.constant 0 : index
    %4 = vector.load %arg2[%c4, %c0_4] : memref<9x256xf32, #tpu.memory_space<vmem>>, vector<1x256xf32>
    %c5 = arith.constant 5 : index
    %c0_5 = arith.constant 0 : index
    %5 = vector.load %arg2[%c5, %c0_5] : memref<9x256xf32, #tpu.memory_space<vmem>>, vector<1x256xf32>
    %c6 = arith.constant 6 : index
    %c0_6 = arith.constant 0 : index
    %6 = vector.load %arg2[%c6, %c0_6] : memref<9x256xf32, #tpu.memory_space<vmem>>, vector<1x256xf32>
    %c7 = arith.constant 7 : index
    %c0_7 = arith.constant 0 : index
    %7 = vector.load %arg2[%c7, %c0_7] : memref<9x256xf32, #tpu.memory_space<vmem>>, vector<1x256xf32>
    %c8 = arith.constant 8 : index
    %c0_8 = arith.constant 0 : index
    %8 = vector.load %arg2[%c8, %c0_8] : memref<9x256xf32, #tpu.memory_space<vmem>>, vector<1x256xf32>
    %c0_9 = arith.constant 0 : index
    %c0_10 = arith.constant 0 : index
    %c0_11 = arith.constant 0 : index
    %9 = vector.load %arg1[%c0_9, %c0_10, %c0_11] : memref<1x4x256xf32, #tpu.memory_space<vmem>>, vector<1x4x256xf32>
    %10 = vector.shape_cast %9 : vector<1x4x256xf32> to vector<4x256xf32>
    %c17_i32 = arith.constant 17 : i32
    %11 = tpu.dynamic_rotate %10 by %c17_i32 dim 1 : vector<4x256xf32>, i32 -> vector<4x256xf32>
    %12 = vector.broadcast %0 : vector<1x256xf32> to vector<4x256xf32>
    %13 = arith.mulf %11, %12 : vector<4x256xf32>
    %c16_i32 = arith.constant 16 : i32
    %14 = tpu.dynamic_rotate %10 by %c16_i32 dim 1 : vector<4x256xf32>, i32 -> vector<4x256xf32>
    %15 = vector.broadcast %1 : vector<1x256xf32> to vector<4x256xf32>
    %16 = arith.mulf %14, %15 : vector<4x256xf32>
    %c15_i32 = arith.constant 15 : i32
    %17 = tpu.dynamic_rotate %10 by %c15_i32 dim 1 : vector<4x256xf32>, i32 -> vector<4x256xf32>
    %18 = vector.broadcast %2 : vector<1x256xf32> to vector<4x256xf32>
    %19 = arith.mulf %17, %18 : vector<4x256xf32>
    %c1_i32 = arith.constant 1 : i32
    %20 = tpu.dynamic_rotate %10 by %c1_i32 dim 1 : vector<4x256xf32>, i32 -> vector<4x256xf32>
    %21 = vector.broadcast %3 : vector<1x256xf32> to vector<4x256xf32>
    %22 = arith.mulf %20, %21 : vector<4x256xf32>
    %23 = vector.broadcast %4 : vector<1x256xf32> to vector<4x256xf32>
    %24 = arith.mulf %10, %23 : vector<4x256xf32>
    %c255_i32 = arith.constant 255 : i32
    %25 = tpu.dynamic_rotate %10 by %c255_i32 dim 1 : vector<4x256xf32>, i32 -> vector<4x256xf32>
    %26 = vector.broadcast %5 : vector<1x256xf32> to vector<4x256xf32>
    %27 = arith.mulf %25, %26 : vector<4x256xf32>
    %c241_i32 = arith.constant 241 : i32
    %28 = tpu.dynamic_rotate %10 by %c241_i32 dim 1 : vector<4x256xf32>, i32 -> vector<4x256xf32>
    %29 = vector.broadcast %6 : vector<1x256xf32> to vector<4x256xf32>
    %30 = arith.mulf %28, %29 : vector<4x256xf32>
    %c240_i32 = arith.constant 240 : i32
    %31 = tpu.dynamic_rotate %10 by %c240_i32 dim 1 : vector<4x256xf32>, i32 -> vector<4x256xf32>
    %32 = vector.broadcast %7 : vector<1x256xf32> to vector<4x256xf32>
    %33 = arith.mulf %31, %32 : vector<4x256xf32>
    %c239_i32 = arith.constant 239 : i32
    %34 = tpu.dynamic_rotate %10 by %c239_i32 dim 1 : vector<4x256xf32>, i32 -> vector<4x256xf32>
    %35 = vector.broadcast %8 : vector<1x256xf32> to vector<4x256xf32>
    %36 = arith.mulf %34, %35 : vector<4x256xf32>
    %cst = arith.constant 0.000000e+00 : f32
    %37 = vector.broadcast %cst : f32 to vector<8x256xf32>
    %c0_12 = arith.constant 0 : index
    %c0_13 = arith.constant 0 : index
    %c0_14 = arith.constant 0 : index
    %38 = vector.load %arg3[%c0_12, %c0_13, %c0_14] : memref<9x8x4xf32, #tpu.memory_space<vmem>>, vector<1x8x4xf32>
    %39 = vector.shape_cast %38 : vector<1x8x4xf32> to vector<8x4xf32>
    %cst_15 = arith.constant dense<0.000000e+00> : vector<8x256xf32>
    %40 = tpu.matmul %39, %13, %cst_15 {dimension_numbers = #tpu.dot_dimension_numbers<[1], [0], [0], [1], [0, 0, 1, 1], [], []>} : vector<8x4xf32>, vector<4x256xf32>, vector<8x256xf32> -> vector<8x256xf32>
    %41 = arith.addf %37, %40 : vector<8x256xf32>
    %c1_16 = arith.constant 1 : index
    %c0_17 = arith.constant 0 : index
    %c0_18 = arith.constant 0 : index
    %42 = vector.load %arg3[%c1_16, %c0_17, %c0_18] : memref<9x8x4xf32, #tpu.memory_space<vmem>>, vector<1x8x4xf32>
    %43 = vector.shape_cast %42 : vector<1x8x4xf32> to vector<8x4xf32>
    %cst_19 = arith.constant dense<0.000000e+00> : vector<8x256xf32>
    %44 = tpu.matmul %43, %16, %cst_19 {dimension_numbers = #tpu.dot_dimension_numbers<[1], [0], [0], [1], [0, 0, 1, 1], [], []>} : vector<8x4xf32>, vector<4x256xf32>, vector<8x256xf32> -> vector<8x256xf32>
    %45 = arith.addf %41, %44 : vector<8x256xf32>
    %c2_20 = arith.constant 2 : index
    %c0_21 = arith.constant 0 : index
    %c0_22 = arith.constant 0 : index
    %46 = vector.load %arg3[%c2_20, %c0_21, %c0_22] : memref<9x8x4xf32, #tpu.memory_space<vmem>>, vector<1x8x4xf32>
    %47 = vector.shape_cast %46 : vector<1x8x4xf32> to vector<8x4xf32>
    %cst_23 = arith.constant dense<0.000000e+00> : vector<8x256xf32>
    %48 = tpu.matmul %47, %19, %cst_23 {dimension_numbers = #tpu.dot_dimension_numbers<[1], [0], [0], [1], [0, 0, 1, 1], [], []>} : vector<8x4xf32>, vector<4x256xf32>, vector<8x256xf32> -> vector<8x256xf32>
    %49 = arith.addf %45, %48 : vector<8x256xf32>
    %c3_24 = arith.constant 3 : index
    %c0_25 = arith.constant 0 : index
    %c0_26 = arith.constant 0 : index
    %50 = vector.load %arg3[%c3_24, %c0_25, %c0_26] : memref<9x8x4xf32, #tpu.memory_space<vmem>>, vector<1x8x4xf32>
    %51 = vector.shape_cast %50 : vector<1x8x4xf32> to vector<8x4xf32>
    %cst_27 = arith.constant dense<0.000000e+00> : vector<8x256xf32>
    %52 = tpu.matmul %51, %22, %cst_27 {dimension_numbers = #tpu.dot_dimension_numbers<[1], [0], [0], [1], [0, 0, 1, 1], [], []>} : vector<8x4xf32>, vector<4x256xf32>, vector<8x256xf32> -> vector<8x256xf32>
    %53 = arith.addf %49, %52 : vector<8x256xf32>
    %c4_28 = arith.constant 4 : index
    %c0_29 = arith.constant 0 : index
    %c0_30 = arith.constant 0 : index
    %54 = vector.load %arg3[%c4_28, %c0_29, %c0_30] : memref<9x8x4xf32, #tpu.memory_space<vmem>>, vector<1x8x4xf32>
    %55 = vector.shape_cast %54 : vector<1x8x4xf32> to vector<8x4xf32>
    %cst_31 = arith.constant dense<0.000000e+00> : vector<8x256xf32>
    %56 = tpu.matmul %55, %24, %cst_31 {dimension_numbers = #tpu.dot_dimension_numbers<[1], [0], [0], [1], [0, 0, 1, 1], [], []>} : vector<8x4xf32>, vector<4x256xf32>, vector<8x256xf32> -> vector<8x256xf32>
    %57 = arith.addf %53, %56 : vector<8x256xf32>
    %c5_32 = arith.constant 5 : index
    %c0_33 = arith.constant 0 : index
    %c0_34 = arith.constant 0 : index
    %58 = vector.load %arg3[%c5_32, %c0_33, %c0_34] : memref<9x8x4xf32, #tpu.memory_space<vmem>>, vector<1x8x4xf32>
    %59 = vector.shape_cast %58 : vector<1x8x4xf32> to vector<8x4xf32>
    %cst_35 = arith.constant dense<0.000000e+00> : vector<8x256xf32>
    %60 = tpu.matmul %59, %27, %cst_35 {dimension_numbers = #tpu.dot_dimension_numbers<[1], [0], [0], [1], [0, 0, 1, 1], [], []>} : vector<8x4xf32>, vector<4x256xf32>, vector<8x256xf32> -> vector<8x256xf32>
    %61 = arith.addf %57, %60 : vector<8x256xf32>
    %c6_36 = arith.constant 6 : index
    %c0_37 = arith.constant 0 : index
    %c0_38 = arith.constant 0 : index
    %62 = vector.load %arg3[%c6_36, %c0_37, %c0_38] : memref<9x8x4xf32, #tpu.memory_space<vmem>>, vector<1x8x4xf32>
    %63 = vector.shape_cast %62 : vector<1x8x4xf32> to vector<8x4xf32>
    %cst_39 = arith.constant dense<0.000000e+00> : vector<8x256xf32>
    %64 = tpu.matmul %63, %30, %cst_39 {dimension_numbers = #tpu.dot_dimension_numbers<[1], [0], [0], [1], [0, 0, 1, 1], [], []>} : vector<8x4xf32>, vector<4x256xf32>, vector<8x256xf32> -> vector<8x256xf32>
    %65 = arith.addf %61, %64 : vector<8x256xf32>
    %c7_40 = arith.constant 7 : index
    %c0_41 = arith.constant 0 : index
    %c0_42 = arith.constant 0 : index
    %66 = vector.load %arg3[%c7_40, %c0_41, %c0_42] : memref<9x8x4xf32, #tpu.memory_space<vmem>>, vector<1x8x4xf32>
    %67 = vector.shape_cast %66 : vector<1x8x4xf32> to vector<8x4xf32>
    %cst_43 = arith.constant dense<0.000000e+00> : vector<8x256xf32>
    %68 = tpu.matmul %67, %33, %cst_43 {dimension_numbers = #tpu.dot_dimension_numbers<[1], [0], [0], [1], [0, 0, 1, 1], [], []>} : vector<8x4xf32>, vector<4x256xf32>, vector<8x256xf32> -> vector<8x256xf32>
    %69 = arith.addf %65, %68 : vector<8x256xf32>
    %c8_44 = arith.constant 8 : index
    %c0_45 = arith.constant 0 : index
    %c0_46 = arith.constant 0 : index
    %70 = vector.load %arg3[%c8_44, %c0_45, %c0_46] : memref<9x8x4xf32, #tpu.memory_space<vmem>>, vector<1x8x4xf32>
    %71 = vector.shape_cast %70 : vector<1x8x4xf32> to vector<8x4xf32>
    %cst_47 = arith.constant dense<0.000000e+00> : vector<8x256xf32>
    %72 = tpu.matmul %71, %36, %cst_47 {dimension_numbers = #tpu.dot_dimension_numbers<[1], [0], [0], [1], [0, 0, 1, 1], [], []>} : vector<8x4xf32>, vector<4x256xf32>, vector<8x256xf32> -> vector<8x256xf32>
    %73 = arith.addf %69, %72 : vector<8x256xf32>
    %c0_48 = arith.constant 0 : index
    %c0_49 = arith.constant 0 : index
    %74 = vector.load %arg4[%c0_48, %c0_49] : memref<8x1xf32, #tpu.memory_space<vmem>>, vector<8x1xf32>
    %75 = vector.broadcast %74 : vector<8x1xf32> to vector<8x256xf32>
    %76 = arith.addf %73, %75 : vector<8x256xf32>
    %c0_50 = arith.constant 0 : index
    %c0_51 = arith.constant 0 : index
    %77 = vector.load %arg5[%c0_50, %c0_51] : memref<8x1xf32, #tpu.memory_space<vmem>>, vector<8x1xf32>
    %cst_52 = arith.constant 0.000000e+00 : f32
    %78 = vector.broadcast %cst_52 : f32 to vector<8x256xf32>
    %79 = arith.cmpf ogt, %76, %78 : vector<8x256xf32>
    %80 = vector.broadcast %77 : vector<8x1xf32> to vector<8x256xf32>
    %81 = arith.mulf %80, %76 : vector<8x256xf32>
    %82 = arith.select %79, %76, %81 : vector<8x256xi1>, vector<8x256xf32>
    %c0_53 = arith.constant 0 : index
    %c0_54 = arith.constant 0 : index
    %c0_55 = arith.constant 0 : index
    %83 = vector.load %arg12[%c0_53, %c0_54, %c0_55] : memref<1x24x256xf32, #tpu.memory_space<vmem>>, vector<1x8x256xf32>
    %84 = vector.shape_cast %83 : vector<1x8x256xf32> to vector<8x256xf32>
    %85 = vector.shape_cast %82 : vector<8x256xf32> to vector<1x8x256xf32>
    tpu.vector_store %arg12[%c0_53, %c0_54, %c0_55], %85 {strides = array<i32>} : memref<1x24x256xf32, #tpu.memory_space<vmem>>, vector<1x8x256xf32>,
    %c17_i32_56 = arith.constant 17 : i32
    %86 = tpu.dynamic_rotate %82 by %c17_i32_56 dim 1 : vector<8x256xf32>, i32 -> vector<8x256xf32>
    %87 = vector.broadcast %0 : vector<1x256xf32> to vector<8x256xf32>
    %88 = arith.mulf %86, %87 : vector<8x256xf32>
    %c16_i32_57 = arith.constant 16 : i32
    %89 = tpu.dynamic_rotate %82 by %c16_i32_57 dim 1 : vector<8x256xf32>, i32 -> vector<8x256xf32>
    %90 = vector.broadcast %1 : vector<1x256xf32> to vector<8x256xf32>
    %91 = arith.mulf %89, %90 : vector<8x256xf32>
    %c15_i32_58 = arith.constant 15 : i32
    %92 = tpu.dynamic_rotate %82 by %c15_i32_58 dim 1 : vector<8x256xf32>, i32 -> vector<8x256xf32>
    %93 = vector.broadcast %2 : vector<1x256xf32> to vector<8x256xf32>
    %94 = arith.mulf %92, %93 : vector<8x256xf32>
    %c1_i32_59 = arith.constant 1 : i32
    %95 = tpu.dynamic_rotate %82 by %c1_i32_59 dim 1 : vector<8x256xf32>, i32 -> vector<8x256xf32>
    %96 = vector.broadcast %3 : vector<1x256xf32> to vector<8x256xf32>
    %97 = arith.mulf %95, %96 : vector<8x256xf32>
    %98 = vector.broadcast %4 : vector<1x256xf32> to vector<8x256xf32>
    %99 = arith.mulf %82, %98 : vector<8x256xf32>
    %c255_i32_60 = arith.constant 255 : i32
    %100 = tpu.dynamic_rotate %82 by %c255_i32_60 dim 1 : vector<8x256xf32>, i32 -> vector<8x256xf32>
    %101 = vector.broadcast %5 : vector<1x256xf32> to vector<8x256xf32>
    %102 = arith.mulf %100, %101 : vector<8x256xf32>
    %c241_i32_61 = arith.constant 241 : i32
    %103 = tpu.dynamic_rotate %82 by %c241_i32_61 dim 1 : vector<8x256xf32>, i32 -> vector<8x256xf32>
    %104 = vector.broadcast %6 : vector<1x256xf32> to vector<8x256xf32>
    %105 = arith.mulf %103, %104 : vector<8x256xf32>
    %c240_i32_62 = arith.constant 240 : i32
    %106 = tpu.dynamic_rotate %82 by %c240_i32_62 dim 1 : vector<8x256xf32>, i32 -> vector<8x256xf32>
    %107 = vector.broadcast %7 : vector<1x256xf32> to vector<8x256xf32>
    %108 = arith.mulf %106, %107 : vector<8x256xf32>
    %c239_i32_63 = arith.constant 239 : i32
    %109 = tpu.dynamic_rotate %82 by %c239_i32_63 dim 1 : vector<8x256xf32>, i32 -> vector<8x256xf32>
    %110 = vector.broadcast %8 : vector<1x256xf32> to vector<8x256xf32>
    %111 = arith.mulf %109, %110 : vector<8x256xf32>
    %112 = tpu.concatenate %88, %91, %94, %97, %99, %102, %105, %108, %111 in 0 : vector<8x256xf32>, vector<8x256xf32>, vector<8x256xf32>, vector<8x256xf32>, vector<8x256xf32>, vector<8x256xf32>, vector<8x256xf32>, vector<8x256xf32>, vector<8x256xf32> -> vector<72x256xf32>
    %c0_64 = arith.constant 0 : index
    %c0_65 = arith.constant 0 : index
    %113 = vector.load %arg6[%c0_64, %c0_65] : memref<8x72xf32, #tpu.memory_space<vmem>>, vector<8x72xf32>
    %cst_66 = arith.constant dense<0.000000e+00> : vector<8x256xf32>
    %114 = tpu.matmul %113, %112, %cst_66 {dimension_numbers = #tpu.dot_dimension_numbers<[1], [0], [0], [1], [0, 0, 1, 1], [], []>} : vector<8x72xf32>, vector<72x256xf32>, vector<8x256xf32> -> vector<8x256xf32>
    %c0_67 = arith.constant 0 : index
    %c0_68 = arith.constant 0 : index
    %115 = vector.load %arg7[%c0_67, %c0_68] : memref<8x1xf32, #tpu.memory_space<vmem>>, vector<8x1xf32>
    %116 = vector.broadcast %115 : vector<8x1xf32> to vector<8x256xf32>
    %117 = arith.addf %114, %116 : vector<8x256xf32>
    %c0_69 = arith.constant 0 : index
    %c0_70 = arith.constant 0 : index
    %118 = vector.load %arg8[%c0_69, %c0_70] : memref<8x1xf32, #tpu.memory_space<vmem>>, vector<8x1xf32>
    %cst_71 = arith.constant 0.000000e+00 : f32
    %119 = vector.broadcast %cst_71 : f32 to vector<8x256xf32>
    %120 = arith.cmpf ogt, %117, %119 : vector<8x256xf32>
    %121 = vector.broadcast %118 : vector<8x1xf32> to vector<8x256xf32>
    %122 = arith.mulf %121, %117 : vector<8x256xf32>
    %123 = arith.select %120, %117, %122 : vector<8x256xi1>, vector<8x256xf32>
    %c0_72 = arith.constant 0 : index
    %c8_73 = arith.constant 8 : index
    %c0_74 = arith.constant 0 : index
    %124 = vector.load %arg12[%c0_72, %c8_73, %c0_74] : memref<1x24x256xf32, #tpu.memory_space<vmem>>, vector<1x8x256xf32>
    %125 = vector.shape_cast %124 : vector<1x8x256xf32> to vector<8x256xf32>
    %126 = vector.shape_cast %123 : vector<8x256xf32> to vector<1x8x256xf32>
    tpu.vector_store %arg12[%c0_72, %c8_73, %c0_74], %126 {strides = array<i32>} : memref<1x24x256xf32, #tpu.memory_space<vmem>>, vector<1x8x256xf32>,
    %c17_i32_75 = arith.constant 17 : i32
    %127 = tpu.dynamic_rotate %123 by %c17_i32_75 dim 1 : vector<8x256xf32>, i32 -> vector<8x256xf32>
    %128 = vector.broadcast %0 : vector<1x256xf32> to vector<8x256xf32>
    %129 = arith.mulf %127, %128 : vector<8x256xf32>
    %c16_i32_76 = arith.constant 16 : i32
    %130 = tpu.dynamic_rotate %123 by %c16_i32_76 dim 1 : vector<8x256xf32>, i32 -> vector<8x256xf32>
    %131 = vector.broadcast %1 : vector<1x256xf32> to vector<8x256xf32>
    %132 = arith.mulf %130, %131 : vector<8x256xf32>
    %c15_i32_77 = arith.constant 15 : i32
    %133 = tpu.dynamic_rotate %123 by %c15_i32_77 dim 1 : vector<8x256xf32>, i32 -> vector<8x256xf32>
    %134 = vector.broadcast %2 : vector<1x256xf32> to vector<8x256xf32>
    %135 = arith.mulf %133, %134 : vector<8x256xf32>
    %c1_i32_78 = arith.constant 1 : i32
    %136 = tpu.dynamic_rotate %123 by %c1_i32_78 dim 1 : vector<8x256xf32>, i32 -> vector<8x256xf32>
    %137 = vector.broadcast %3 : vector<1x256xf32> to vector<8x256xf32>
    %138 = arith.mulf %136, %137 : vector<8x256xf32>
    %139 = vector.broadcast %4 : vector<1x256xf32> to vector<8x256xf32>
    %140 = arith.mulf %123, %139 : vector<8x256xf32>
    %c255_i32_79 = arith.constant 255 : i32
    %141 = tpu.dynamic_rotate %123 by %c255_i32_79 dim 1 : vector<8x256xf32>, i32 -> vector<8x256xf32>
    %142 = vector.broadcast %5 : vector<1x256xf32> to vector<8x256xf32>
    %143 = arith.mulf %141, %142 : vector<8x256xf32>
    %c241_i32_80 = arith.constant 241 : i32
    %144 = tpu.dynamic_rotate %123 by %c241_i32_80 dim 1 : vector<8x256xf32>, i32 -> vector<8x256xf32>
    %145 = vector.broadcast %6 : vector<1x256xf32> to vector<8x256xf32>
    %146 = arith.mulf %144, %145 : vector<8x256xf32>
    %c240_i32_81 = arith.constant 240 : i32
    %147 = tpu.dynamic_rotate %123 by %c240_i32_81 dim 1 : vector<8x256xf32>, i32 -> vector<8x256xf32>
    %148 = vector.broadcast %7 : vector<1x256xf32> to vector<8x256xf32>
    %149 = arith.mulf %147, %148 : vector<8x256xf32>
    %c239_i32_82 = arith.constant 239 : i32
    %150 = tpu.dynamic_rotate %123 by %c239_i32_82 dim 1 : vector<8x256xf32>, i32 -> vector<8x256xf32>
    %151 = vector.broadcast %8 : vector<1x256xf32> to vector<8x256xf32>
    %152 = arith.mulf %150, %151 : vector<8x256xf32>
    %153 = tpu.concatenate %129, %132, %135, %138, %140, %143, %146, %149, %152 in 0 : vector<8x256xf32>, vector<8x256xf32>, vector<8x256xf32>, vector<8x256xf32>, vector<8x256xf32>, vector<8x256xf32>, vector<8x256xf32>, vector<8x256xf32>, vector<8x256xf32> -> vector<72x256xf32>
    %c0_83 = arith.constant 0 : index
    %c0_84 = arith.constant 0 : index
    %154 = vector.load %arg9[%c0_83, %c0_84] : memref<8x72xf32, #tpu.memory_space<vmem>>, vector<8x72xf32>
    %cst_85 = arith.constant dense<0.000000e+00> : vector<8x256xf32>
    %155 = tpu.matmul %154, %153, %cst_85 {dimension_numbers = #tpu.dot_dimension_numbers<[1], [0], [0], [1], [0, 0, 1, 1], [], []>} : vector<8x72xf32>, vector<72x256xf32>, vector<8x256xf32> -> vector<8x256xf32>
    %c0_86 = arith.constant 0 : index
    %c0_87 = arith.constant 0 : index
    %156 = vector.load %arg10[%c0_86, %c0_87] : memref<8x1xf32, #tpu.memory_space<vmem>>, vector<8x1xf32>
    %157 = vector.broadcast %156 : vector<8x1xf32> to vector<8x256xf32>
    %158 = arith.addf %155, %157 : vector<8x256xf32>
    %c0_88 = arith.constant 0 : index
    %c0_89 = arith.constant 0 : index
    %159 = vector.load %arg11[%c0_88, %c0_89] : memref<8x1xf32, #tpu.memory_space<vmem>>, vector<8x1xf32>
    %cst_90 = arith.constant 0.000000e+00 : f32
    %160 = vector.broadcast %cst_90 : f32 to vector<8x256xf32>
    %161 = arith.cmpf ogt, %158, %160 : vector<8x256xf32>
    %162 = vector.broadcast %159 : vector<8x1xf32> to vector<8x256xf32>
    %163 = arith.mulf %162, %158 : vector<8x256xf32>
    %164 = arith.select %161, %158, %163 : vector<8x256xi1>, vector<8x256xf32>
    %c0_91 = arith.constant 0 : index
    %c16 = arith.constant 16 : index
    %c0_92 = arith.constant 0 : index
    %165 = vector.load %arg12[%c0_91, %c16, %c0_92] : memref<1x24x256xf32, #tpu.memory_space<vmem>>, vector<1x8x256xf32>
    %166 = vector.shape_cast %165 : vector<1x8x256xf32> to vector<8x256xf32>
    %167 = vector.shape_cast %164 : vector<8x256xf32> to vector<1x8x256xf32>
    tpu.vector_store %arg12[%c0_91, %c16, %c0_92], %167 {strides = array<i32>} : memref<1x24x256xf32, #tpu.memory_space<vmem>>, vector<1x8x256xf32>,
    return
  }
  func.func @transform_0(%arg0: i32) -> (i32, i32, i32) {
    %c0_i32 = arith.constant 0 : i32
    %c0_i32_0 = arith.constant 0 : i32
    %c0_i32_1 = arith.constant 0 : i32
    return %arg0, %c0_i32, %c0_i32_0 : i32, i32, i32
  }
  func.func @transform_1(%arg0: i32) -> (i32, i32) {
    %c0_i32 = arith.constant 0 : i32
    %c0_i32_0 = arith.constant 0 : i32
    %c0_i32_1 = arith.constant 0 : i32
    return %c0_i32, %c0_i32_0 : i32, i32
  }
  func.func @transform_2(%arg0: i32) -> (i32, i32, i32) {
    %c0_i32 = arith.constant 0 : i32
    %c0_i32_0 = arith.constant 0 : i32
    %c0_i32_1 = arith.constant 0 : i32
    %c0_i32_2 = arith.constant 0 : i32
    return %c0_i32, %c0_i32_0, %c0_i32_1 : i32, i32, i32
  }
  func.func @transform_3(%arg0: i32) -> (i32, i32) {
    %c0_i32 = arith.constant 0 : i32
    %c0_i32_0 = arith.constant 0 : i32
    %c0_i32_1 = arith.constant 0 : i32
    return %c0_i32, %c0_i32_0 : i32, i32
  }
  func.func @transform_4(%arg0: i32) -> (i32, i32) {
    %c0_i32 = arith.constant 0 : i32
    %c0_i32_0 = arith.constant 0 : i32
    %c0_i32_1 = arith.constant 0 : i32
    return %c0_i32, %c0_i32_0 : i32, i32
  }
  func.func @transform_5(%arg0: i32) -> (i32, i32) {
    %c0_i32 = arith.constant 0 : i32
    %c0_i32_0 = arith.constant 0 : i32
    %c0_i32_1 = arith.constant 0 : i32
    return %c0_i32, %c0_i32_0 : i32, i32
  }
  func.func @transform_6(%arg0: i32) -> (i32, i32) {
    %c0_i32 = arith.constant 0 : i32
    %c0_i32_0 = arith.constant 0 : i32
    %c0_i32_1 = arith.constant 0 : i32
    return %c0_i32, %c0_i32_0 : i32, i32
  }
  func.func @transform_7(%arg0: i32) -> (i32, i32) {
    %c0_i32 = arith.constant 0 : i32
    %c0_i32_0 = arith.constant 0 : i32
    %c0_i32_1 = arith.constant 0 : i32
    return %c0_i32, %c0_i32_0 : i32, i32
  }
  func.func @transform_8(%arg0: i32) -> (i32, i32) {
    %c0_i32 = arith.constant 0 : i32
    %c0_i32_0 = arith.constant 0 : i32
    %c0_i32_1 = arith.constant 0 : i32
    return %c0_i32, %c0_i32_0 : i32, i32
  }
  func.func @transform_9(%arg0: i32) -> (i32, i32) {
    %c0_i32 = arith.constant 0 : i32
    %c0_i32_0 = arith.constant 0 : i32
    %c0_i32_1 = arith.constant 0 : i32
    return %c0_i32, %c0_i32_0 : i32, i32
  }
  func.func @transform_10(%arg0: i32) -> (i32, i32) {
    %c0_i32 = arith.constant 0 : i32
    %c0_i32_0 = arith.constant 0 : i32
    %c0_i32_1 = arith.constant 0 : i32
    return %c0_i32, %c0_i32_0 : i32, i32
  }
  func.func @transform_11(%arg0: i32) -> (i32, i32, i32) {
    %c0_i32 = arith.constant 0 : i32
    %c0_i32_0 = arith.constant 0 : i32
    %c0_i32_1 = arith.constant 0 : i32
    return %arg0, %c0_i32, %c0_i32_0 : i32, i32, i32
  }
}

</mosaic_0001>

<llo_original>
// kernel: tpu_custom_call.1
$region0: #{tpu_custom_call.1}
  #allocation0 [shape = 'u32[]', space=smem, size = 0x4, offset = 0x4, fixed_abs, tag = 'smem constant byte address 0x4 - core index']
  #allocation1 [shape = 'u32[144,128]{1,0:T(1,128)}', space=vmem, size = 0x12000, scoped, tag = 'internal scratch']
  %s0 = inlined_call_operand.vmem [shape: f32[2,4,256], index: 0, kind: input, shape index: {}]
  %s1 = inlined_call_operand.vmem [shape: f32[9,256], index: 1, kind: input, shape index: {}]
  %s2 = inlined_call_operand.vmem [shape: f32[9,8,4], index: 2, kind: input, shape index: {}]
  %s3 = inlined_call_operand.vmem [shape: f32[8,1], index: 3, kind: input, shape index: {}]
  %s4 = inlined_call_operand.vmem [shape: f32[8,1], index: 4, kind: input, shape index: {}]
  %s5 = inlined_call_operand.vmem [shape: f32[8,72], index: 5, kind: input, shape index: {}]
  %s6 = inlined_call_operand.vmem [shape: f32[8,1], index: 6, kind: input, shape index: {}]
  %s7 = inlined_call_operand.vmem [shape: f32[8,1], index: 7, kind: input, shape index: {}]
  %s8 = inlined_call_operand.vmem [shape: f32[8,72], index: 8, kind: input, shape index: {}]
  %s9 = inlined_call_operand.vmem [shape: f32[8,1], index: 9, kind: input, shape index: {}]
  %s10 = inlined_call_operand.vmem [shape: f32[8,1], index: 10, kind: input, shape index: {}]
  %s11 = inlined_call_operand.hbm [shape: f32[2,24,256], index: 11, kind: output, shape index: {}]
  %s12 = sld [smem:[#allocation0]]
  $region77: #{tpu_custom_call.1} parent=0
    _
  %s14 = ssub.s32 1, %s12
  %s15 = scalar_select 0, %s14, %s12
  $region1: #{tpu_custom_call.1} parent=0
    #allocation2 [shape = 'u8[49152]{0}', space=vmem, size = 0xc000, scoped, tag = 'output window, operand 0']
    #allocation3 [shape = 's32[2]{0}', space=sflag, size = 0x8, scoped, tag = 'scoped memory for tpu_custom_call.1']
    %16 = vsyncpa [#allocation3], 0
    %s17 = scalar_lea.sflag [#allocation3], 1
    %18 = vsyncpa %s17, 0
    loop: start=0, step=1, limit=4
    $region2: #{tpu_custom_call.1} parent=1 // loop_pre_header
      _
    $region3: #{tpu_custom_call.1} parent=1 // loop_header
      %s20 = sphi 0, %s24
      %p21 = scmp.ge.s32.totalorder %s20, 4
      %s30 = sphi 0, %s32
      %s33 = sphi 0, %s30
      %s34 = sphi 0, %s33
      %s50 = sphi 0, %s34
      %s54 = sphi 0, %s54
      %s56 = sphi 0, %s54
      %s57 = sphi 0, %s56
      %s71 = sphi 0, %s57
      %s75 = sphi 0, %s75
      %s77 = sphi 0, %s75
      %s78 = sphi 0, %s77
      %s92 = sphi 0, %s78
      %s96 = sphi 0, %s96
      %s98 = sphi 0, %s96
      %s99 = sphi 0, %s98
      %s113 = sphi 0, %s99
      %s117 = sphi 0, %s117
      %s119 = sphi 0, %s117
      %s120 = sphi 0, %s119
      %s134 = sphi 0, %s120
      %s138 = sphi 0, %s138
      %s140 = sphi 0, %s138
      %s141 = sphi 0, %s140
      %s155 = sphi 0, %s141
      %s159 = sphi 0, %s159
      %s161 = sphi 0, %s159
      %s162 = sphi 0, %s161
      %s176 = sphi 0, %s162
      %s180 = sphi 0, %s180
      %s182 = sphi 0, %s180
      %s183 = sphi 0, %s182
      %s197 = sphi 0, %s183
      %s201 = sphi 0, %s201
      %s203 = sphi 0, %s201
      %s204 = sphi 0, %s203
      %s218 = sphi 0, %s204
      %s222 = sphi 0, %s222
      %s224 = sphi 0, %s222
      %s225 = sphi 0, %s224
      %s239 = sphi 0, %s225
      %s243 = sphi 0, %s243
      %s245 = sphi 0, %s243
      %s246 = sphi 0, %s245
      %s260 = sphi 0, %s246
      %s266 = sphi 0, %s268
      %s269 = sphi 0, %s266
      %s270 = sphi 0, %s269
      %s286 = sphi 0, %s270
    $region4: #{tpu_custom_call.1} parent=1 // loop_header_branch
      %23 = sbr.rel (%p21) target = $region8
    $region5: #{tpu_custom_call.1} parent=1 // loop_body
      %s25 = ssub.s32 %s20, 1
      %s26 = ssub.s32 %s20, 2
      %s27 = sadd.s32 %s20, 1
      %s28 = ssub.s32 %s20, %s27
      %p29 = scmp.eq.s32.totalorder %s28, 0
      %s31 = sadd.s32 %s30, 1
      %s32 = scalar_select %p29, %s30, %s31
      %p35 = pneg %p29
      %p36 = scmp.eq.s32.totalorder %s20, 1
      %p37 = por %p35, %p36
      %p38 = scmp.ne.s32.totalorder %s30, %s33
      %p39 = scmp.eq.s32.totalorder %s20, 0
      %p40 = por %p38, %p39
      %p41 = scmp.ne.s32.totalorder %s30, %s33
      %p42 = scmp.eq.s32.totalorder %s25, 1
      %p43 = por %p41, %p42
      %p44 = scmp.ne.s32.totalorder %s33, %s34
      %p45 = scmp.eq.s32.totalorder %s25, 0
      %p46 = por %p44, %p45
      %p47 = scmp.ne.s32.totalorder %s33, %s34
      %p48 = scmp.eq.s32.totalorder %s26, 1
      %p49 = por %p47, %p48
      %p51 = scmp.ne.s32.totalorder %s34, %s50
      %p52 = scmp.eq.s32.totalorder %s26, 0
      %p53 = por %p51, %p52
      %s55 = sadd.s32 %s54, 1
      %p58 = scmp.eq.s32.totalorder %s20, 1
      %p59 = scmp.ne.s32.totalorder %s54, %s56
      %p60 = scmp.eq.s32.totalorder %s20, 0
      %p61 = por %p59, %p60
      %p62 = scmp.ne.s32.totalorder %s54, %s56
      %p63 = scmp.eq.s32.totalorder %s25, 1
      %p64 = por %p62, %p63
      %p65 = scmp.ne.s32.totalorder %s56, %s57
      %p66 = scmp.eq.s32.totalorder %s25, 0
      %p67 = por %p65, %p66
      %p68 = scmp.ne.s32.totalorder %s56, %s57
      %p69 = scmp.eq.s32.totalorder %s26, 1
      %p70 = por %p68, %p69
      %p72 = scmp.ne.s32.totalorder %s57, %s71
      %p73 = scmp.eq.s32.totalorder %s26, 0
      %p74 = por %p72, %p73
      %s76 = sadd.s32 %s75, 1
      %p79 = scmp.eq.s32.totalorder %s20, 1
      %p80 = scmp.ne.s32.totalorder %s75, %s77
      %p81 = scmp.eq.s32.totalorder %s20, 0
      %p82 = por %p80, %p81
      %p83 = scmp.ne.s32.totalorder %s75, %s77
      %p84 = scmp.eq.s32.totalorder %s25, 1
      %p85 = por %p83, %p84
      %p86 = scmp.ne.s32.totalorder %s77, %s78
      %p87 = scmp.eq.s32.totalorder %s25, 0
      %p88 = por %p86, %p87
      %p89 = scmp.ne.s32.totalorder %s77, %s78
      %p90 = scmp.eq.s32.totalorder %s26, 1
      %p91 = por %p89, %p90
      %p93 = scmp.ne.s32.totalorder %s78, %s92
      %p94 = scmp.eq.s32.totalorder %s26, 0
      %p95 = por %p93, %p94
      %s97 = sadd.s32 %s96, 1
      %p100 = scmp.eq.s32.totalorder %s20, 1
      %p101 = scmp.ne.s32.totalorder %s96, %s98
      %p102 = scmp.eq.s32.totalorder %s20, 0
      %p103 = por %p101, %p102
      %p104 = scmp.ne.s32.totalorder %s96, %s98
      %p105 = scmp.eq.s32.totalorder %s25, 1
      %p106 = por %p104, %p105
      %p107 = scmp.ne.s32.totalorder %s98, %s99
      %p108 = scmp.eq.s32.totalorder %s25, 0
      %p109 = por %p107, %p108
      %p110 = scmp.ne.s32.totalorder %s98, %s99
      %p111 = scmp.eq.s32.totalorder %s26, 1
      %p112 = por %p110, %p111
      %p114 = scmp.ne.s32.totalorder %s99, %s113
      %p115 = scmp.eq.s32.totalorder %s26, 0
      %p116 = por %p114, %p115
      %s118 = sadd.s32 %s117, 1
      %p121 = scmp.eq.s32.totalorder %s20, 1
      %p122 = scmp.ne.s32.totalorder %s117, %s119
      %p123 = scmp.eq.s32.totalorder %s20, 0
      %p124 = por %p122, %p123
      %p125 = scmp.ne.s32.totalorder %s117, %s119
      %p126 = scmp.eq.s32.totalorder %s25, 1
      %p127 = por %p125, %p126
      %p128 = scmp.ne.s32.totalorder %s119, %s120
      %p129 = scmp.eq.s32.totalorder %s25, 0
      %p130 = por %p128, %p129
      %p131 = scmp.ne.s32.totalorder %s119, %s120
      %p132 = scmp.eq.s32.totalorder %s26, 1
      %p133 = por %p131, %p132
      %p135 = scmp.ne.s32.totalorder %s120, %s134
      %p136 = scmp.eq.s32.totalorder %s26, 0
      %p137 = por %p135, %p136
      %s139 = sadd.s32 %s138, 1
      %p142 = scmp.eq.s32.totalorder %s20, 1
      %p143 = scmp.ne.s32.totalorder %s138, %s140
      %p144 = scmp.eq.s32.totalorder %s20, 0
      %p145 = por %p143, %p144
      %p146 = scmp.ne.s32.totalorder %s138, %s140
      %p147 = scmp.eq.s32.totalorder %s25, 1
      %p148 = por %p146, %p147
      %p149 = scmp.ne.s32.totalorder %s140, %s141
      %p150 = scmp.eq.s32.totalorder %s25, 0
      %p151 = por %p149, %p150
      %p152 = scmp.ne.s32.totalorder %s140, %s141
      %p153 = scmp.eq.s32.totalorder %s26, 1
      %p154 = por %p152, %p153
      %p156 = scmp.ne.s32.totalorder %s141, %s155
      %p157 = scmp.eq.s32.totalorder %s26, 0
      %p158 = por %p156, %p157
      %s160 = sadd.s32 %s159, 1
      %p163 = scmp.eq.s32.totalorder %s20, 1
      %p164 = scmp.ne.s32.totalorder %s159, %s161
      %p165 = scmp.eq.s32.totalorder %s20, 0
      %p166 = por %p164, %p165
      %p167 = scmp.ne.s32.totalorder %s159, %s161
      %p168 = scmp.eq.s32.totalorder %s25, 1
      %p169 = por %p167, %p168
      %p170 = scmp.ne.s32.totalorder %s161, %s162
      %p171 = scmp.eq.s32.totalorder %s25, 0
      %p172 = por %p170, %p171
      %p173 = scmp.ne.s32.totalorder %s161, %s162
      %p174 = scmp.eq.s32.totalorder %s26, 1
      %p175 = por %p173, %p174
      %p177 = scmp.ne.s32.totalorder %s162, %s176
      %p178 = scmp.eq.s32.totalorder %s26, 0
      %p179 = por %p177, %p178
      %s181 = sadd.s32 %s180, 1
      %p184 = scmp.eq.s32.totalorder %s20, 1
      %p185 = scmp.ne.s32.totalorder %s180, %s182
      %p186 = scmp.eq.s32.totalorder %s20, 0
      %p187 = por %p185, %p186
      %p188 = scmp.ne.s32.totalorder %s180, %s182
      %p189 = scmp.eq.s32.totalorder %s25, 1
      %p190 = por %p188, %p189
      %p191 = scmp.ne.s32.totalorder %s182, %s183
      %p192 = scmp.eq.s32.totalorder %s25, 0
      %p193 = por %p191, %p192
      %p194 = scmp.ne.s32.totalorder %s182, %s183
      %p195 = scmp.eq.s32.totalorder %s26, 1
      %p196 = por %p194, %p195
      %p198 = scmp.ne.s32.totalorder %s183, %s197
      %p199 = scmp.eq.s32.totalorder %s26, 0
      %p200 = por %p198, %p199
      %s202 = sadd.s32 %s201, 1
      %p205 = scmp.eq.s32.totalorder %s20, 1
      %p206 = scmp.ne.s32.totalorder %s201, %s203
      %p207 = scmp.eq.s32.totalorder %s20, 0
      %p208 = por %p206, %p207
      %p209 = scmp.ne.s32.totalorder %s201, %s203
      %p210 = scmp.eq.s32.totalorder %s25, 1
      %p211 = por %p209, %p210
      %p212 = scmp.ne.s32.totalorder %s203, %s204
      %p213 = scmp.eq.s32.totalorder %s25, 0
      %p214 = por %p212, %p213
      %p215 = scmp.ne.s32.totalorder %s203, %s204
      %p216 = scmp.eq.s32.totalorder %s26, 1
      %p217 = por %p215, %p216
      %p219 = scmp.ne.s32.totalorder %s204, %s218
      %p220 = scmp.eq.s32.totalorder %s26, 0
      %p221 = por %p219, %p220
      %s223 = sadd.s32 %s222, 1
      %p226 = scmp.eq.s32.totalorder %s20, 1
      %p227 = scmp.ne.s32.totalorder %s222, %s224
      %p228 = scmp.eq.s32.totalorder %s20, 0
      %p229 = por %p227, %p228
      %p230 = scmp.ne.s32.totalorder %s222, %s224
      %p231 = scmp.eq.s32.totalorder %s25, 1
      %p232 = por %p230, %p231
      %p233 = scmp.ne.s32.totalorder %s224, %s225
      %p234 = scmp.eq.s32.totalorder %s25, 0
      %p235 = por %p233, %p234
      %p236 = scmp.ne.s32.totalorder %s224, %s225
      %p237 = scmp.eq.s32.totalorder %s26, 1
      %p238 = por %p236, %p237
      %p240 = scmp.ne.s32.totalorder %s225, %s239
      %p241 = scmp.eq.s32.totalorder %s26, 0
      %p242 = por %p240, %p241
      %s244 = sadd.s32 %s243, 1
      %p247 = scmp.eq.s32.totalorder %s20, 1
      %p248 = scmp.ne.s32.totalorder %s243, %s245
      %p249 = scmp.eq.s32.totalorder %s20, 0
      %p250 = por %p248, %p249
      %p251 = scmp.ne.s32.totalorder %s243, %s245
      %p252 = scmp.eq.s32.totalorder %s25, 1
      %p253 = por %p251, %p252
      %p254 = scmp.ne.s32.totalorder %s245, %s246
      %p255 = scmp.eq.s32.totalorder %s25, 0
      %p256 = por %p254, %p255
      %p257 = scmp.ne.s32.totalorder %s245, %s246
      %p258 = scmp.eq.s32.totalorder %s26, 1
      %p259 = por %p257, %p258
      %p261 = scmp.ne.s32.totalorder %s246, %s260
      %p262 = scmp.eq.s32.totalorder %s26, 0
      %p263 = por %p261, %p262
      %s264 = ssub.s32 %s20, %s27
      %p265 = scmp.eq.s32.totalorder %s264, 0
      %s267 = sadd.s32 %s266, 1
      %s268 = scalar_select %p265, %s266, %s267
      %p271 = pneg %p265
      %p272 = scmp.eq.s32.totalorder %s20, 1
      %p273 = por %p271, %p272
      %p274 = scmp.ne.s32.totalorder %s266, %s269
      %p275 = scmp.eq.s32.totalorder %s20, 0
      %p276 = por %p274, %p275
      %p277 = scmp.ne.s32.totalorder %s266, %s269
      %p278 = scmp.eq.s32.totalorder %s25, 1
      %p279 = por %p277, %p278
      %p280 = scmp.ne.s32.totalorder %s269, %s270
      %p281 = scmp.eq.s32.totalorder %s25, 0
      %p282 = por %p280, %p281
      %p283 = scmp.ne.s32.totalorder %s269, %s270
      %p284 = scmp.eq.s32.totalorder %s26, 1
      %p285 = por %p283, %p284
      %p287 = scmp.ne.s32.totalorder %s270, %s286
      %p288 = scmp.eq.s32.totalorder %s26, 0
      %p289 = por %p287, %p288
      %p290 = scmp.le.s32.totalorder 1, %s20
      %p291 = scmp.lt.s32.totalorder %s20, 3
      %p292 = pnand %p290, %p291
      %p293 = pneg %p292
      // Predicated region
      $region9: #{tpu_custom_call.1} parent=5 // pred_check
        _
      $region10: #{tpu_custom_call.1} parent=5 // pred_check_branch
        %295 = sbr.rel (%p292) target = $region12
      $region11: #{tpu_custom_call.1} parent=5 // pred_region
        %s296 = ssub.s32 %s20, 1
        // Predicated region
        $region13: #{tpu_custom_call.1} parent=11 // pred_check
          %p297 = pneg %p67
        $region14: #{tpu_custom_call.1} parent=11 // pred_check_branch
          %299 = sbr.rel (%p297) target = $region16
        $region15: #{tpu_custom_call.1} parent=11 // pred_region
          _
        $region16: #{tpu_custom_call.1} parent=11 // pred_fallthru
          _
        // Predicated region
        $region17: #{tpu_custom_call.1} parent=11 // pred_check
          %p300 = pneg %p88
        $region18: #{tpu_custom_call.1} parent=11 // pred_check_branch
          %302 = sbr.rel (%p300) target = $region20
        $region19: #{tpu_custom_call.1} parent=11 // pred_region
          _
        $region20: #{tpu_custom_call.1} parent=11 // pred_fallthru
          _
        // Predicated region
        $region21: #{tpu_custom_call.1} parent=11 // pred_check
          %p303 = pneg %p109
        $region22: #{tpu_custom_call.1} parent=11 // pred_check_branch
          %305 = sbr.rel (%p303) target = $region24
        $region23: #{tpu_custom_call.1} parent=11 // pred_region
          _
        $region24: #{tpu_custom_call.1} parent=11 // pred_fallthru
          _
        // Predicated region
        $region25: #{tpu_custom_call.1} parent=11 // pred_check
          %p306 = pneg %p130
        $region26: #{tpu_custom_call.1} parent=11 // pred_check_branch
          %308 = sbr.rel (%p306) target = $region28
        $region27: #{tpu_custom_call.1} parent=11 // pred_region
          _
        $region28: #{tpu_custom_call.1} parent=11 // pred_fallthru
          _
        // Predicated region
        $region29: #{tpu_custom_call.1} parent=11 // pred_check
          %p309 = pneg %p151
        $region30: #{tpu_custom_call.1} parent=11 // pred_check_branch
          %311 = sbr.rel (%p309) target = $region32
        $region31: #{tpu_custom_call.1} parent=11 // pred_region
          _
        $region32: #{tpu_custom_call.1} parent=11 // pred_fallthru
          _
        // Predicated region
        $region33: #{tpu_custom_call.1} parent=11 // pred_check
          %p312 = pneg %p172
        $region34: #{tpu_custom_call.1} parent=11 // pred_check_branch
          %314 = sbr.rel (%p312) target = $region36
        $region35: #{tpu_custom_call.1} parent=11 // pred_region
          _
        $region36: #{tpu_custom_call.1} parent=11 // pred_fallthru
          _
        // Predicated region
        $region37: #{tpu_custom_call.1} parent=11 // pred_check
          %p315 = pneg %p193
        $region38: #{tpu_custom_call.1} parent=11 // pred_check_branch
          %317 = sbr.rel (%p315) target = $region40
        $region39: #{tpu_custom_call.1} parent=11 // pred_region
          _
        $region40: #{tpu_custom_call.1} parent=11 // pred_fallthru
          _
        // Predicated region
        $region41: #{tpu_custom_call.1} parent=11 // pred_check
          %p318 = pneg %p214
        $region42: #{tpu_custom_call.1} parent=11 // pred_check_branch
          %320 = sbr.rel (%p318) target = $region44
        $region43: #{tpu_custom_call.1} parent=11 // pred_region
          _
        $region44: #{tpu_custom_call.1} parent=11 // pred_fallthru
          _
        // Predicated region
        $region45: #{tpu_custom_call.1} parent=11 // pred_check
          %p321 = pneg %p235
        $region46: #{tpu_custom_call.1} parent=11 // pred_check_branch
          %323 = sbr.rel (%p321) target = $region48
        $region47: #{tpu_custom_call.1} parent=11 // pred_region
          _
        $region48: #{tpu_custom_call.1} parent=11 // pred_fallthru
          _
        // Predicated region
        $region49: #{tpu_custom_call.1} parent=11 // pred_check
          %p324 = pneg %p256
        $region50: #{tpu_custom_call.1} parent=11 // pred_check_branch
          %326 = sbr.rel (%p324) target = $region52
        $region51: #{tpu_custom_call.1} parent=11 // pred_region
          _
        $region52: #{tpu_custom_call.1} parent=11 // pred_fallthru
          _
      $region12: #{tpu_custom_call.1} parent=5 // pred_fallthru
        _
      %p327 = scmp.lt.s32.totalorder %s20, 2
      // Predicated region
      $region53: #{tpu_custom_call.1} parent=5 // pred_check
        %p328 = pneg %p327
      $region54: #{tpu_custom_call.1} parent=5 // pred_check_branch
        %330 = sbr.rel (%p328) target = $region56
      $region55: #{tpu_custom_call.1} parent=5 // pred_region
        // Predicated region
        $region57: #{tpu_custom_call.1} parent=55 // pred_check
          %p331 = pneg %p40
        $region58: #{tpu_custom_call.1} parent=55 // pred_check_branch
          %333 = sbr.rel (%p331) target = $region60
        $region59: #{tpu_custom_call.1} parent=55 // pred_region
          %p334 = scmp.lt.s32.totalorder %s20, 1
          %s335 = scalar_select %p334, %s20, 1
          %s336 = smul.addr %s335, 2
          %s337 = smul.addr %s336, 4
          %s338 = scalar_lea.vmem %s0, %s337
        $region60: #{tpu_custom_call.1} parent=55 // pred_fallthru
          _
      $region56: #{tpu_custom_call.1} parent=5 // pred_fallthru
        _
      %p339 = scmp.le.s32.totalorder 1, %s20
      %p340 = scmp.lt.s32.totalorder %s20, 3
      %p341 = pnand %p339, %p340
      %p342 = pneg %p341
      // Predicated region
      $region61: #{tpu_custom_call.1} parent=5 // pred_check
        _
      $region62: #{tpu_custom_call.1} parent=5 // pred_check_branch
        %344 = sbr.rel (%p341) target = $region64
      $region63: #{tpu_custom_call.1} parent=5 // pred_region
        %s345 = ssub.s32 %s20, 1
        %p346 = scmp.lt.s32.totalorder %s25, 1
        %s347 = scalar_select %p346, %s25, 1
        %s348 = smul.addr %s347, 2
        %s349 = smul.addr %s348, 4
        %s350 = scalar_lea.vmem %s0, %s349
        %p351 = pneg %p46
        %p352 = pneg %p43
        %p353 = pneg %p67
        %p354 = pneg %p64
        %p355 = pneg %p88
        %p356 = pneg %p85
        %p357 = pneg %p109
        %p358 = pneg %p106
        %p359 = pneg %p130
        %p360 = pneg %p127
        %p361 = pneg %p151
        %p362 = pneg %p148
        %p363 = pneg %p172
        %p364 = pneg %p169
        %p365 = pneg %p193
        %p366 = pneg %p190
        %p367 = pneg %p214
        %p368 = pneg %p211
        %p369 = pneg %p235
        %p370 = pneg %p232
        %p371 = pneg %p256
        %p372 = pneg %p253
        %p373 = pneg %p282
        %p374 = pneg %p279
        %s375 = sand.u32 %s269, 1
        %s376 = scalar_lea.sflag [#allocation3], %s375
        %s377 = sand.u32 %s269, 1
        %s378 = smul.addr %s377, 48
        %s379 = scalar_lea.vmem [#allocation2], %s378
        %p380 = scmp.lt.s32.totalorder %s25, 1
        %s381 = scalar_select %p380, %s25, 1
        %s382 = smul.addr %s381, 2
        %s383 = smul.addr %s382, 4
        %s384 = scalar_lea.vmem %s0, %s383
        %v385 = vld [vmem:[%s1] ss:$8 sm:$0x3]
        %s386 = scalar_lea.vmem %s1, 1
        %v387 = vld [vmem:[%s386] ss:$8 sm:$0x3]
        %s388 = scalar_lea.vmem %s1, 2
        %v389 = vld [vmem:[%s388] ss:$8 sm:$0x3]
        %s390 = scalar_lea.vmem %s1, 3
        %v391 = vld [vmem:[%s390] ss:$8 sm:$0x3]
        %s392 = scalar_lea.vmem %s1, 4
        %v393 = vld [vmem:[%s392] ss:$8 sm:$0x3]
        %s394 = scalar_lea.vmem %s1, 5
        %v395 = vld [vmem:[%s394] ss:$8 sm:$0x3]
        %s396 = scalar_lea.vmem %s1, 6
        %v397 = vld [vmem:[%s396] ss:$8 sm:$0x3]
        %s398 = scalar_lea.vmem %s1, 7
        %v399 = vld [vmem:[%s398] ss:$8 sm:$0x3]
        %s400 = scalar_lea.vmem %s1, 16
        %v401 = vld [vmem:[%s400] ss:$8 sm:$0x3]
        %v402 = vld [vmem:[%s384] sm:$0xff]
        %v404 = vcombine.high %v402, %v402
        %406 = vrot.lane.b32.xlu0 %v402, 17
        %v407 = vpop.permute.xlu0 %406
        %408 = vrot.lane.b32.xlu0 %v404, 17
        %v409 = vpop.permute.xlu0 %408
        %v410 = vlaneseq
        %v411 = vand.u32 %v410, 127
        %vm412 = vcmp.lt.s32.totalorder %v411, 17
        %v413 = vsel %vm412, %v407, %v409
        %v414 = vsel %vm412, %v409, %v407
        %v416 = vlaneseq
        %v417 = vshrl.u32 %v416, 7
        %v418 = vsub.s32 0, %v417
        %v419 = vrot.slane %v385, %v418
        %v420 = vlaneseq
        %v421 = vshrl.u32 %v420, 7
        %v422 = vsub.s32 1, %v421
        %v423 = vrot.slane %v385, %v422
        %v426 = vmul.f32 %v414, %v419
        %v427 = vmul.f32 %v413, %v423
        %428 = vrot.lane.b32.xlu0 %v402, 16
        %v429 = vpop.permute.xlu0 %428
        %430 = vrot.lane.b32.xlu0 %v404, 16
        %v431 = vpop.permute.xlu0 %430
        %vm432 = vcmp.lt.s32.totalorder %v411, 16
        %v433 = vsel %vm432, %v429, %v431
        %v434 = vsel %vm432, %v431, %v429
        %v436 = vlaneseq
        %v437 = vshrl.u32 %v436, 7
        %v438 = vsub.s32 0, %v437
        %v439 = vrot.slane %v387, %v438
        %v440 = vlaneseq
        %v441 = vshrl.u32 %v440, 7
        %v442 = vsub.s32 1, %v441
        %v443 = vrot.slane %v387, %v442
        %v446 = vmul.f32 %v434, %v439
        %v447 = vmul.f32 %v433, %v443
        %448 = vrot.lane.b32.xlu0 %v402, 15
        %v449 = vpop.permute.xlu0 %448
        %450 = vrot.lane.b32.xlu0 %v404, 15
        %v451 = vpop.permute.xlu0 %450
        %vm452 = vcmp.lt.s32.totalorder %v411, 15
        %v453 = vsel %vm452, %v449, %v451
        %v454 = vsel %vm452, %v451, %v449
        %v456 = vlaneseq
        %v457 = vshrl.u32 %v456, 7
        %v458 = vsub.s32 0, %v457
        %v459 = vrot.slane %v389, %v458
        %v460 = vlaneseq
        %v461 = vshrl.u32 %v460, 7
        %v462 = vsub.s32 1, %v461
        %v463 = vrot.slane %v389, %v462
        %v466 = vmul.f32 %v454, %v459
        %v467 = vmul.f32 %v453, %v463
        %468 = vrot.lane.b32.xlu0 %v402, 1
        %v469 = vpop.permute.xlu0 %468
        %470 = vrot.lane.b32.xlu0 %v404, 1
        %v471 = vpop.permute.xlu0 %470
        %vm472 = vcmp.lt.s32.totalorder %v411, 1
        %v473 = vsel %vm472, %v469, %v471
        %v474 = vsel %vm472, %v471, %v469
        %v476 = vlaneseq
        %v477 = vshrl.u32 %v476, 7
        %v478 = vsub.s32 0, %v477
        %v479 = vrot.slane %v391, %v478
        %v480 = vlaneseq
        %v481 = vshrl.u32 %v480, 7
        %v482 = vsub.s32 1, %v481
        %v483 = vrot.slane %v391, %v482
        %v486 = vmul.f32 %v474, %v479
        %v487 = vmul.f32 %v473, %v483
        %v489 = vlaneseq
        %v490 = vshrl.u32 %v489, 7
        %v491 = vsub.s32 0, %v490
        %v492 = vrot.slane %v393, %v491
        %v493 = vlaneseq
        %v494 = vshrl.u32 %v493, 7
        %v495 = vsub.s32 1, %v494
        %v496 = vrot.slane %v393, %v495
        %v497 = vcombine.low %v492, %v496
        %v499 = vmul.f32 %v402, %v497
        %500 = vrot.lane.b32.xlu0 %v402, 127
        %v501 = vpop.permute.xlu0 %500
        %502 = vrot.lane.b32.xlu0 %v404, 127
        %v503 = vpop.permute.xlu0 %502
        %vm504 = vcmp.lt.s32.totalorder %v411, 127
        %v505 = vsel %vm504, %v501, %v503
        %v506 = vsel %vm504, %v503, %v501
        %v508 = vlaneseq
        %v509 = vshrl.u32 %v508, 7
        %v510 = vsub.s32 0, %v509
        %v511 = vrot.slane %v395, %v510
        %v512 = vlaneseq
        %v513 = vshrl.u32 %v512, 7
        %v514 = vsub.s32 1, %v513
        %v515 = vrot.slane %v395, %v514
        %v518 = vmul.f32 %v505, %v511
        %v519 = vmul.f32 %v506, %v515
        %520 = vrot.lane.b32.xlu0 %v402, 113
        %v521 = vpop.permute.xlu0 %520
        %522 = vrot.lane.b32.xlu0 %v404, 113
        %v523 = vpop.permute.xlu0 %522
        %vm524 = vcmp.lt.s32.totalorder %v411, 113
        %v525 = vsel %vm524, %v521, %v523
        %v526 = vsel %vm524, %v523, %v521
        %v528 = vlaneseq
        %v529 = vshrl.u32 %v528, 7
        %v530 = vsub.s32 0, %v529
        %v531 = vrot.slane %v397, %v530
        %v532 = vlaneseq
        %v533 = vshrl.u32 %v532, 7
        %v534 = vsub.s32 1, %v533
        %v535 = vrot.slane %v397, %v534
        %v538 = vmul.f32 %v525, %v531
        %v539 = vmul.f32 %v526, %v535
        %540 = vrot.lane.b32.xlu0 %v402, 112
        %v541 = vpop.permute.xlu0 %540
        %542 = vrot.lane.b32.xlu0 %v404, 112
        %v543 = vpop.permute.xlu0 %542
        %vm544 = vcmp.lt.s32.totalorder %v411, 112
        %v545 = vsel %vm544, %v541, %v543
        %v546 = vsel %vm544, %v543, %v541
        %v548 = vlaneseq
        %v549 = vshrl.u32 %v548, 7
        %v550 = vsub.s32 0, %v549
        %v551 = vrot.slane %v399, %v550
        %v552 = vlaneseq
        %v553 = vshrl.u32 %v552, 7
        %v554 = vsub.s32 1, %v553
        %v555 = vrot.slane %v399, %v554
        %v558 = vmul.f32 %v545, %v551
        %v559 = vmul.f32 %v546, %v555
        %560 = vrot.lane.b32.xlu0 %v402, 111
        %v561 = vpop.permute.xlu0 %560
        %562 = vrot.lane.b32.xlu0 %v404, 111
        %v563 = vpop.permute.xlu0 %562
        %vm564 = vcmp.lt.s32.totalorder %v411, 111
        %v565 = vsel %vm564, %v561, %v563
        %v566 = vsel %vm564, %v563, %v561
        %v568 = vlaneseq
        %v569 = vshrl.u32 %v568, 7
        %v570 = vsub.s32 0, %v569
        %v571 = vrot.slane %v401, %v570
        %v572 = vlaneseq
        %v573 = vshrl.u32 %v572, 7
        %v574 = vsub.s32 1, %v573
        %v575 = vrot.slane %v401, %v574
        %v578 = vmul.f32 %v565, %v571
        %v579 = vmul.f32 %v566, %v575
        %v580 = vld [vmem:[%s2] sm:$0xff]
        %s581 = scalar_lea.vmem %s2, 8
        %v582 = vld [vmem:[%s581] sm:$0xff]
        %vm583 = vcmask 31744
        %v585 = vsel %vm583, %v582, 0
        %vm587 = vcmask 1043456
        %v589 = vsel %vm587, %v446, 0
        %v592 = vsel %vm587, %v447, 0
        %594 = vmatprep.subr.mxu0 %v592
        %595 = vmatpush1.msra.mxu0 %v589
        %596 = vmatprep.subr.mxu0 0.0
        %597 = vmatpush1.msra.mxu0 0.0
        %598 = vmatprep.subr.mxu0 0.0
        %599 = vmatpush1.msra.mxu0 0.0
        %600 = vmatprep.subr.mxu0 0.0
        %601 = vmatpush1.msra.mxu0 0.0
        %602 = vmatprep.subr.mxu0 0.0
        %603 = vmatpush1.msra.mxu0 0.0
        %604 = vmatprep.subr.mxu0 0.0
        %605 = vmatpush1.msra.mxu0 0.0
        %606 = vmatprep.subr.mxu0 0.0
        %607 = vmatpush1.msra.mxu0 0.0
        %608 = vmatprep.subr.mxu0 0.0
        %609 = vmatpush1.msra.mxu0 0.0
        %610 = vmatprep.subr.mxu0 0.0
        %611 = vmatpush1.msra.mxu0 0.0
        %612 = vmatprep.subr.mxu0 0.0
        %613 = vmatpush1.msra.mxu0 0.0
        %614 = vmatprep.subr.mxu0 0.0
        %615 = vmatpush1.msra.mxu0 0.0
        %616 = vmatprep.subr.mxu0 0.0
        %617 = vmatpush1.msra.mxu0 0.0
        %618 = vmatprep.subr.mxu0 0.0
        %619 = vmatpush1.msra.mxu0 0.0
        %620 = vmatprep.subr.mxu0 0.0
        %621 = vmatpush1.msra.mxu0 0.0
        %622 = vmatprep.subr.mxu0 0.0
        %623 = vmatpush1.msra.mxu0 0.0
        %624 = vmatprep.subr.mxu0 0.0
        %625 = vmatpush1.msra.mxu0 0.0
        %626 = vmatprep.subr.mxu0 0.0
        %627 = vmatpush1.msra.mxu0 0.0
        %628 = vmatprep.subr.mxu0 0.0
        %629 = vmatpush1.msra.mxu0 0.0
        %630 = vmatprep.subr.mxu0 0.0
        %631 = vmatpush1.msra.mxu0 0.0
        %632 = vmatprep.subr.mxu0 0.0
        %633 = vmatpush1.msra.mxu0 0.0
        %634 = vmatprep.subr.mxu0 0.0
        %635 = vmatpush1.msra.mxu0 0.0
        %636 = vmatprep.subr.mxu0 0.0
        %637 = vmatpush1.msra.mxu0 0.0
        %638 = vmatprep.subr.mxu0 0.0
        %639 = vmatpush1.msra.mxu0 0.0
        %640 = vmatprep.subr.mxu0 0.0
        %641 = vmatpush1.msra.mxu0 0.0
        %642 = vmatprep.subr.mxu0 0.0
        %643 = vmatpush1.msra.mxu0 0.0
        %644 = vmatprep.subr.mxu0 0.0
        %645 = vmatpush1.msra.mxu0 0.0
        %646 = vmatprep.subr.mxu0 0.0
        %647 = vmatpush1.msra.mxu0 0.0
        %648 = vmatprep.subr.mxu0 0.0
        %649 = vmatpush1.msra.mxu0 0.0
        %650 = vmatprep.subr.mxu0 0.0
        %651 = vmatpush1.msra.mxu0 0.0
        %652 = vmatprep.subr.mxu0 0.0
        %653 = vmatpush1.msra.mxu0 0.0
        %654 = vmatprep.subr.mxu0 0.0
        %655 = vmatpush1.msra.mxu0 0.0
        %656 = vmatprep.subr.mxu0 0.0
        %657 = vmatpush1.msra.mxu0 0.0
        %658 = vmatprep.mubr.f32.mxu0 0.0
        %659 = vmatmul.mubr.f32.gmra.mrb[0].mxu0 %v585
        %v660 = vpop.f32.mrb[0].mxu0
        %v661 = vadd.f32 0.0, %v660
        %v662 = vpop.f32.mrb[0].mxu0
        %v663 = vadd.f32 0.0, %v662
        %664 = vdwg.mxu0
        %v666 = vsel %vm583, %v580, 0
        %v669 = vsel %vm587, %v426, 0
        %v672 = vsel %vm587, %v427, 0
        %674 = vmatprep.subr.mxu0 %v672
        %675 = vmatpush1.msra.mxu0 %v669
        %676 = vmatprep.subr.mxu0 0.0
        %677 = vmatpush1.msra.mxu0 0.0
        %678 = vmatprep.subr.mxu0 0.0
        %679 = vmatpush1.msra.mxu0 0.0
        %680 = vmatprep.subr.mxu0 0.0
        %681 = vmatpush1.msra.mxu0 0.0
        %682 = vmatprep.subr.mxu0 0.0
        %683 = vmatpush1.msra.mxu0 0.0
        %684 = vmatprep.subr.mxu0 0.0
        %685 = vmatpush1.msra.mxu0 0.0
        %686 = vmatprep.subr.mxu0 0.0
        %687 = vmatpush1.msra.mxu0 0.0
        %688 = vmatprep.subr.mxu0 0.0
        %689 = vmatpush1.msra.mxu0 0.0
        %690 = vmatprep.subr.mxu0 0.0
        %691 = vmatpush1.msra.mxu0 0.0
        %692 = vmatprep.subr.mxu0 0.0
        %693 = vmatpush1.msra.mxu0 0.0
        %694 = vmatprep.subr.mxu0 0.0
        %695 = vmatpush1.msra.mxu0 0.0
        %696 = vmatprep.subr.mxu0 0.0
        %697 = vmatpush1.msra.mxu0 0.0
        %698 = vmatprep.subr.mxu0 0.0
        %699 = vmatpush1.msra.mxu0 0.0
        %700 = vmatprep.subr.mxu0 0.0
        %701 = vmatpush1.msra.mxu0 0.0
        %702 = vmatprep.subr.mxu0 0.0
        %703 = vmatpush1.msra.mxu0 0.0
        %704 = vmatprep.subr.mxu0 0.0
        %705 = vmatpush1.msra.mxu0 0.0
        %706 = vmatprep.subr.mxu0 0.0
        %707 = vmatpush1.msra.mxu0 0.0
        %708 = vmatprep.subr.mxu0 0.0
        %709 = vmatpush1.msra.mxu0 0.0
        %710 = vmatprep.subr.mxu0 0.0
        %711 = vmatpush1.msra.mxu0 0.0
        %712 = vmatprep.subr.mxu0 0.0
        %713 = vmatpush1.msra.mxu0 0.0
        %714 = vmatprep.subr.mxu0 0.0
        %715 = vmatpush1.msra.mxu0 0.0
        %716 = vmatprep.subr.mxu0 0.0
        %717 = vmatpush1.msra.mxu0 0.0
        %718 = vmatprep.subr.mxu0 0.0
        %719 = vmatpush1.msra.mxu0 0.0
        %720 = vmatprep.subr.mxu0 0.0
        %721 = vmatpush1.msra.mxu0 0.0
        %722 = vmatprep.subr.mxu0 0.0
        %723 = vmatpush1.msra.mxu0 0.0
        %724 = vmatprep.subr.mxu0 0.0
        %725 = vmatpush1.msra.mxu0 0.0
        %726 = vmatprep.subr.mxu0 0.0
        %727 = vmatpush1.msra.mxu0 0.0
        %728 = vmatprep.subr.mxu0 0.0
        %729 = vmatpush1.msra.mxu0 0.0
        %730 = vmatprep.subr.mxu0 0.0
        %731 = vmatpush1.msra.mxu0 0.0
        %732 = vmatprep.subr.mxu0 0.0
        %733 = vmatpush1.msra.mxu0 0.0
        %734 = vmatprep.subr.mxu0 0.0
        %735 = vmatpush1.msra.mxu0 0.0
        %736 = vmatprep.subr.mxu0 0.0
        %737 = vmatpush1.msra.mxu0 0.0
        %738 = vmatprep.mubr.f32.mxu0 0.0
        %739 = vmatmul.mubr.f32.gmra.mrb[0].mxu0 %v666
        %v740 = vpop.f32.mrb[0].mxu0
        %v741 = vadd.f32 %v661, %v740
        %v742 = vpop.f32.mrb[0].mxu0
        %v743 = vadd.f32 %v663, %v742
        %744 = vdwg.mxu0
        %s745 = scalar_lea.vmem %s2, 16
        %v746 = vld [vmem:[%s745] sm:$0xff]
        %v748 = vsel %vm583, %v746, 0
        %v751 = vsel %vm587, %v466, 0
        %v754 = vsel %vm587, %v467, 0
        %756 = vmatprep.subr.mxu0 %v754
        %757 = vmatpush1.msra.mxu0 %v751
        %758 = vmatprep.subr.mxu0 0.0
        %759 = vmatpush1.msra.mxu0 0.0
        %760 = vmatprep.subr.mxu0 0.0
        %761 = vmatpush1.msra.mxu0 0.0
        %762 = vmatprep.subr.mxu0 0.0
        %763 = vmatpush1.msra.mxu0 0.0
        %764 = vmatprep.subr.mxu0 0.0
        %765 = vmatpush1.msra.mxu0 0.0
        %766 = vmatprep.subr.mxu0 0.0
        %767 = vmatpush1.msra.mxu0 0.0
        %768 = vmatprep.subr.mxu0 0.0
        %769 = vmatpush1.msra.mxu0 0.0
        %770 = vmatprep.subr.mxu0 0.0
        %771 = vmatpush1.msra.mxu0 0.0
        %772 = vmatprep.subr.mxu0 0.0
        %773 = vmatpush1.msra.mxu0 0.0
        %774 = vmatprep.subr.mxu0 0.0
        %775 = vmatpush1.msra.mxu0 0.0
        %776 = vmatprep.subr.mxu0 0.0
        %777 = vmatpush1.msra.mxu0 0.0
        %778 = vmatprep.subr.mxu0 0.0
        %779 = vmatpush1.msra.mxu0 0.0
        %780 = vmatprep.subr.mxu0 0.0
        %781 = vmatpush1.msra.mxu0 0.0
        %782 = vmatprep.subr.mxu0 0.0
        %783 = vmatpush1.msra.mxu0 0.0
        %784 = vmatprep.subr.mxu0 0.0
        %785 = vmatpush1.msra.mxu0 0.0
        %786 = vmatprep.subr.mxu0 0.0
        %787 = vmatpush1.msra.mxu0 0.0
        %788 = vmatprep.subr.mxu0 0.0
        %789 = vmatpush1.msra.mxu0 0.0
        %790 = vmatprep.subr.mxu0 0.0
        %791 = vmatpush1.msra.mxu0 0.0
        %792 = vmatprep.subr.mxu0 0.0
        %793 = vmatpush1.msra.mxu0 0.0
        %794 = vmatprep.subr.mxu0 0.0
        %795 = vmatpush1.msra.mxu0 0.0
        %796 = vmatprep.subr.mxu0 0.0
        %797 = vmatpush1.msra.mxu0 0.0
        %798 = vmatprep.subr.mxu0 0.0
        %799 = vmatpush1.msra.mxu0 0.0
        %800 = vmatprep.subr.mxu0 0.0
        %801 = vmatpush1.msra.mxu0 0.0
        %802 = vmatprep.subr.mxu0 0.0
        %803 = vmatpush1.msra.mxu0 0.0
        %804 = vmatprep.subr.mxu0 0.0
        %805 = vmatpush1.msra.mxu0 0.0
        %806 = vmatprep.subr.mxu0 0.0
        %807 = vmatpush1.msra.mxu0 0.0
        %808 = vmatprep.subr.mxu0 0.0
        %809 = vmatpush1.msra.mxu0 0.0
        %810 = vmatprep.subr.mxu0 0.0
        %811 = vmatpush1.msra.mxu0 0.0
        %812 = vmatprep.subr.mxu0 0.0
        %813 = vmatpush1.msra.mxu0 0.0
        %814 = vmatprep.subr.mxu0 0.0
        %815 = vmatpush1.msra.mxu0 0.0
        %816 = vmatprep.subr.mxu0 0.0
        %817 = vmatpush1.msra.mxu0 0.0
        %818 = vmatprep.subr.mxu0 0.0
        %819 = vmatpush1.msra.mxu0 0.0
        %820 = vmatprep.mubr.f32.mxu0 0.0
        %821 = vmatmul.mubr.f32.gmra.mrb[0].mxu0 %v748
        %v822 = vpop.f32.mrb[0].mxu0
        %v823 = vadd.f32 0.0, %v822
        %v824 = vpop.f32.mrb[0].mxu0
        %v825 = vadd.f32 0.0, %v824
        %826 = vdwg.mxu0
        %v827 = vadd.f32 %v741, %v823
        %v828 = vadd.f32 %v743, %v825
        %s829 = scalar_lea.vmem %s2, 24
        %v830 = vld [vmem:[%s829] sm:$0xff]
        %v832 = vsel %vm583, %v830, 0
        %v835 = vsel %vm587, %v486, 0
        %v838 = vsel %vm587, %v487, 0
        %840 = vmatprep.subr.mxu0 %v838
        %841 = vmatpush1.msra.mxu0 %v835
        %842 = vmatprep.subr.mxu0 0.0
        %843 = vmatpush1.msra.mxu0 0.0
        %844 = vmatprep.subr.mxu0 0.0
        %845 = vmatpush1.msra.mxu0 0.0
        %846 = vmatprep.subr.mxu0 0.0
        %847 = vmatpush1.msra.mxu0 0.0
        %848 = vmatprep.subr.mxu0 0.0
        %849 = vmatpush1.msra.mxu0 0.0
        %850 = vmatprep.subr.mxu0 0.0
        %851 = vmatpush1.msra.mxu0 0.0
        %852 = vmatprep.subr.mxu0 0.0
        %853 = vmatpush1.msra.mxu0 0.0
        %854 = vmatprep.subr.mxu0 0.0
        %855 = vmatpush1.msra.mxu0 0.0
        %856 = vmatprep.subr.mxu0 0.0
        %857 = vmatpush1.msra.mxu0 0.0
        %858 = vmatprep.subr.mxu0 0.0
        %859 = vmatpush1.msra.mxu0 0.0
        %860 = vmatprep.subr.mxu0 0.0
        %861 = vmatpush1.msra.mxu0 0.0
        %862 = vmatprep.subr.mxu0 0.0
        %863 = vmatpush1.msra.mxu0 0.0
        %864 = vmatprep.subr.mxu0 0.0
        %865 = vmatpush1.msra.mxu0 0.0
        %866 = vmatprep.subr.mxu0 0.0
        %867 = vmatpush1.msra.mxu0 0.0
        %868 = vmatprep.subr.mxu0 0.0
        %869 = vmatpush1.msra.mxu0 0.0
        %870 = vmatprep.subr.mxu0 0.0
        %871 = vmatpush1.msra.mxu0 0.0
        %872 = vmatprep.subr.mxu0 0.0
        %873 = vmatpush1.msra.mxu0 0.0
        %874 = vmatprep.subr.mxu0 0.0
        %875 = vmatpush1.msra.mxu0 0.0
        %876 = vmatprep.subr.mxu0 0.0
        %877 = vmatpush1.msra.mxu0 0.0
        %878 = vmatprep.subr.mxu0 0.0
        %879 = vmatpush1.msra.mxu0 0.0
        %880 = vmatprep.subr.mxu0 0.0
        %881 = vmatpush1.msra.mxu0 0.0
        %882 = vmatprep.subr.mxu0 0.0
        %883 = vmatpush1.msra.mxu0 0.0
        %884 = vmatprep.subr.mxu0 0.0
        %885 = vmatpush1.msra.mxu0 0.0
        %886 = vmatprep.subr.mxu0 0.0
        %887 = vmatpush1.msra.mxu0 0.0
        %888 = vmatprep.subr.mxu0 0.0
        %889 = vmatpush1.msra.mxu0 0.0
        %890 = vmatprep.subr.mxu0 0.0
        %891 = vmatpush1.msra.mxu0 0.0
        %892 = vmatprep.subr.mxu0 0.0
        %893 = vmatpush1.msra.mxu0 0.0
        %894 = vmatprep.subr.mxu0 0.0
        %895 = vmatpush1.msra.mxu0 0.0
        %896 = vmatprep.subr.mxu0 0.0
        %897 = vmatpush1.msra.mxu0 0.0
        %898 = vmatprep.subr.mxu0 0.0
        %899 = vmatpush1.msra.mxu0 0.0
        %900 = vmatprep.subr.mxu0 0.0
        %901 = vmatpush1.msra.mxu0 0.0
        %902 = vmatprep.subr.mxu0 0.0
        %903 = vmatpush1.msra.mxu0 0.0
        %904 = vmatprep.mubr.f32.mxu0 0.0
        %905 = vmatmul.mubr.f32.gmra.mrb[0].mxu0 %v832
        %v906 = vpop.f32.mrb[0].mxu0
        %v907 = vadd.f32 0.0, %v906
        %v908 = vpop.f32.mrb[0].mxu0
        %v909 = vadd.f32 0.0, %v908
        %910 = vdwg.mxu0
        %v911 = vadd.f32 %v827, %v907
        %v912 = vadd.f32 %v828, %v909
        %s913 = scalar_lea.vmem %s2, 32
        %v914 = vld [vmem:[%s913] sm:$0xff]
        %v916 = vcombine.high %v499, %v499
        %v918 = vsel %vm583, %v914, 0
        %v920 = vsel %vm587, %v499, 0
        %v922 = vsel %vm587, %v916, 0
        %924 = vmatprep.subr.mxu0 %v922
        %925 = vmatpush1.msra.mxu0 %v920
        %926 = vmatprep.subr.mxu0 0.0
        %927 = vmatpush1.msra.mxu0 0.0
        %928 = vmatprep.subr.mxu0 0.0
        %929 = vmatpush1.msra.mxu0 0.0
        %930 = vmatprep.subr.mxu0 0.0
        %931 = vmatpush1.msra.mxu0 0.0
        %932 = vmatprep.subr.mxu0 0.0
        %933 = vmatpush1.msra.mxu0 0.0
        %934 = vmatprep.subr.mxu0 0.0
        %935 = vmatpush1.msra.mxu0 0.0
        %936 = vmatprep.subr.mxu0 0.0
        %937 = vmatpush1.msra.mxu0 0.0
        %938 = vmatprep.subr.mxu0 0.0
        %939 = vmatpush1.msra.mxu0 0.0
        %940 = vmatprep.subr.mxu0 0.0
        %941 = vmatpush1.msra.mxu0 0.0
        %942 = vmatprep.subr.mxu0 0.0
        %943 = vmatpush1.msra.mxu0 0.0
        %944 = vmatprep.subr.mxu0 0.0
        %945 = vmatpush1.msra.mxu0 0.0
        %946 = vmatprep.subr.mxu0 0.0
        %947 = vmatpush1.msra.mxu0 0.0
        %948 = vmatprep.subr.mxu0 0.0
        %949 = vmatpush1.msra.mxu0 0.0
        %950 = vmatprep.subr.mxu0 0.0
        %951 = vmatpush1.msra.mxu0 0.0
        %952 = vmatprep.subr.mxu0 0.0
        %953 = vmatpush1.msra.mxu0 0.0
        %954 = vmatprep.subr.mxu0 0.0
        %955 = vmatpush1.msra.mxu0 0.0
        %956 = vmatprep.subr.mxu0 0.0
        %957 = vmatpush1.msra.mxu0 0.0
        %958 = vmatprep.subr.mxu0 0.0
        %959 = vmatpush1.msra.mxu0 0.0
        %960 = vmatprep.subr.mxu0 0.0
        %961 = vmatpush1.msra.mxu0 0.0
        %962 = vmatprep.subr.mxu0 0.0
        %963 = vmatpush1.msra.mxu0 0.0
        %964 = vmatprep.subr.mxu0 0.0
        %965 = vmatpush1.msra.mxu0 0.0
        %966 = vmatprep.subr.mxu0 0.0
        %967 = vmatpush1.msra.mxu0 0.0
        %968 = vmatprep.subr.mxu0 0.0
        %969 = vmatpush1.msra.mxu0 0.0
        %970 = vmatprep.subr.mxu0 0.0
        %971 = vmatpush1.msra.mxu0 0.0
        %972 = vmatprep.subr.mxu0 0.0
        %973 = vmatpush1.msra.mxu0 0.0
        %974 = vmatprep.subr.mxu0 0.0
        %975 = vmatpush1.msra.mxu0 0.0
        %976 = vmatprep.subr.mxu0 0.0
        %977 = vmatpush1.msra.mxu0 0.0
        %978 = vmatprep.subr.mxu0 0.0
        %979 = vmatpush1.msra.mxu0 0.0
        %980 = vmatprep.subr.mxu0 0.0
        %981 = vmatpush1.msra.mxu0 0.0
        %982 = vmatprep.subr.mxu0 0.0
        %983 = vmatpush1.msra.mxu0 0.0
        %984 = vmatprep.subr.mxu0 0.0
        %985 = vmatpush1.msra.mxu0 0.0
        %986 = vmatprep.subr.mxu0 0.0
        %987 = vmatpush1.msra.mxu0 0.0
        %988 = vmatprep.mubr.f32.mxu0 0.0
        %989 = vmatmul.mubr.f32.gmra.mrb[0].mxu0 %v918
        %v990 = vpop.f32.mrb[0].mxu0
        %v991 = vadd.f32 0.0, %v990
        %v992 = vpop.f32.mrb[0].mxu0
        %v993 = vadd.f32 0.0, %v992
        %994 = vdwg.mxu0
        %v995 = vadd.f32 %v911, %v991
        %v996 = vadd.f32 %v912, %v993
        %s997 = scalar_lea.vmem %s2, 40
        %v998 = vld [vmem:[%s997] sm:$0xff]
        %v1000 = vsel %vm583, %v998, 0
        %v1003 = vsel %vm587, %v518, 0
        %v1006 = vsel %vm587, %v519, 0
        %1008 = vmatprep.subr.mxu0 %v1006
        %1009 = vmatpush1.msra.mxu0 %v1003
        %1010 = vmatprep.subr.mxu0 0.0
        %1011 = vmatpush1.msra.mxu0 0.0
        %1012 = vmatprep.subr.mxu0 0.0
        %1013 = vmatpush1.msra.mxu0 0.0
        %1014 = vmatprep.subr.mxu0 0.0
        %1015 = vmatpush1.msra.mxu0 0.0
        %1016 = vmatprep.subr.mxu0 0.0
        %1017 = vmatpush1.msra.mxu0 0.0
        %1018 = vmatprep.subr.mxu0 0.0
        %1019 = vmatpush1.msra.mxu0 0.0
        %1020 = vmatprep.subr.mxu0 0.0
        %1021 = vmatpush1.msra.mxu0 0.0
        %1022 = vmatprep.subr.mxu0 0.0
        %1023 = vmatpush1.msra.mxu0 0.0
        %1024 = vmatprep.subr.mxu0 0.0
        %1025 = vmatpush1.msra.mxu0 0.0
        %1026 = vmatprep.subr.mxu0 0.0
        %1027 = vmatpush1.msra.mxu0 0.0
        %1028 = vmatprep.subr.mxu0 0.0
        %1029 = vmatpush1.msra.mxu0 0.0
        %1030 = vmatprep.subr.mxu0 0.0
        %1031 = vmatpush1.msra.mxu0 0.0
        %1032 = vmatprep.subr.mxu0 0.0
        %1033 = vmatpush1.msra.mxu0 0.0
        %1034 = vmatprep.subr.mxu0 0.0
        %1035 = vmatpush1.msra.mxu0 0.0
        %1036 = vmatprep.subr.mxu0 0.0
        %1037 = vmatpush1.msra.mxu0 0.0
        %1038 = vmatprep.subr.mxu0 0.0
        %1039 = vmatpush1.msra.mxu0 0.0
        %1040 = vmatprep.subr.mxu0 0.0
        %1041 = vmatpush1.msra.mxu0 0.0
        %1042 = vmatprep.subr.mxu0 0.0
        %1043 = vmatpush1.msra.mxu0 0.0
        %1044 = vmatprep.subr.mxu0 0.0
        %1045 = vmatpush1.msra.mxu0 0.0
        %1046 = vmatprep.subr.mxu0 0.0
        %1047 = vmatpush1.msra.mxu0 0.0
        %1048 = vmatprep.subr.mxu0 0.0
        %1049 = vmatpush1.msra.mxu0 0.0
        %1050 = vmatprep.subr.mxu0 0.0
        %1051 = vmatpush1.msra.mxu0 0.0
        %1052 = vmatprep.subr.mxu0 0.0
        %1053 = vmatpush1.msra.mxu0 0.0
        %1054 = vmatprep.subr.mxu0 0.0
        %1055 = vmatpush1.msra.mxu0 0.0
        %1056 = vmatprep.subr.mxu0 0.0
        %1057 = vmatpush1.msra.mxu0 0.0
        %1058 = vmatprep.subr.mxu0 0.0
        %1059 = vmatpush1.msra.mxu0 0.0
        %1060 = vmatprep.subr.mxu0 0.0
        %1061 = vmatpush1.msra.mxu0 0.0
        %1062 = vmatprep.subr.mxu0 0.0
        %1063 = vmatpush1.msra.mxu0 0.0
        %1064 = vmatprep.subr.mxu0 0.0
        %1065 = vmatpush1.msra.mxu0 0.0
        %1066 = vmatprep.subr.mxu0 0.0
        %1067 = vmatpush1.msra.mxu0 0.0
        %1068 = vmatprep.subr.mxu0 0.0
        %1069 = vmatpush1.msra.mxu0 0.0
        %1070 = vmatprep.subr.mxu0 0.0
        %1071 = vmatpush1.msra.mxu0 0.0
        %1072 = vmatprep.mubr.f32.mxu0 0.0
        %1073 = vmatmul.mubr.f32.gmra.mrb[0].mxu0 %v1000
        %v1074 = vpop.f32.mrb[0].mxu0
        %v1075 = vadd.f32 0.0, %v1074
        %v1076 = vpop.f32.mrb[0].mxu0
        %v1077 = vadd.f32 0.0, %v1076
        %1078 = vdwg.mxu0
        %v1079 = vadd.f32 %v995, %v1075
        %v1080 = vadd.f32 %v996, %v1077
        %s1081 = scalar_lea.vmem %s2, 48
        %v1082 = vld [vmem:[%s1081] sm:$0xff]
        %v1084 = vsel %vm583, %v1082, 0
        %v1087 = vsel %vm587, %v538, 0
        %v1090 = vsel %vm587, %v539, 0
        %1092 = vmatprep.subr.mxu0 %v1090
        %1093 = vmatpush1.msra.mxu0 %v1087
        %1094 = vmatprep.subr.mxu0 0.0
        %1095 = vmatpush1.msra.mxu0 0.0
        %1096 = vmatprep.subr.mxu0 0.0
        %1097 = vmatpush1.msra.mxu0 0.0
        %1098 = vmatprep.subr.mxu0 0.0
        %1099 = vmatpush1.msra.mxu0 0.0
        %1100 = vmatprep.subr.mxu0 0.0
        %1101 = vmatpush1.msra.mxu0 0.0
        %1102 = vmatprep.subr.mxu0 0.0
        %1103 = vmatpush1.msra.mxu0 0.0
        %1104 = vmatprep.subr.mxu0 0.0
        %1105 = vmatpush1.msra.mxu0 0.0
        %1106 = vmatprep.subr.mxu0 0.0
        %1107 = vmatpush1.msra.mxu0 0.0
        %1108 = vmatprep.subr.mxu0 0.0
        %1109 = vmatpush1.msra.mxu0 0.0
        %1110 = vmatprep.subr.mxu0 0.0
        %1111 = vmatpush1.msra.mxu0 0.0
        %1112 = vmatprep.subr.mxu0 0.0
        %1113 = vmatpush1.msra.mxu0 0.0
        %1114 = vmatprep.subr.mxu0 0.0
        %1115 = vmatpush1.msra.mxu0 0.0
        %1116 = vmatprep.subr.mxu0 0.0
        %1117 = vmatpush1.msra.mxu0 0.0
        %1118 = vmatprep.subr.mxu0 0.0
        %1119 = vmatpush1.msra.mxu0 0.0
        %1120 = vmatprep.subr.mxu0 0.0
        %1121 = vmatpush1.msra.mxu0 0.0
        %1122 = vmatprep.subr.mxu0 0.0
        %1123 = vmatpush1.msra.mxu0 0.0
        %1124 = vmatprep.subr.mxu0 0.0
        %1125 = vmatpush1.msra.mxu0 0.0
        %1126 = vmatprep.subr.mxu0 0.0
        %1127 = vmatpush1.msra.mxu0 0.0
        %1128 = vmatprep.subr.mxu0 0.0
        %1129 = vmatpush1.msra.mxu0 0.0
        %1130 = vmatprep.subr.mxu0 0.0
        %1131 = vmatpush1.msra.mxu0 0.0
        %1132 = vmatprep.subr.mxu0 0.0
        %1133 = vmatpush1.msra.mxu0 0.0
        %1134 = vmatprep.subr.mxu0 0.0
        %1135 = vmatpush1.msra.mxu0 0.0
        %1136 = vmatprep.subr.mxu0 0.0
        %1137 = vmatpush1.msra.mxu0 0.0
        %1138 = vmatprep.subr.mxu0 0.0
        %1139 = vmatpush1.msra.mxu0 0.0
        %1140 = vmatprep.subr.mxu0 0.0
        %1141 = vmatpush1.msra.mxu0 0.0
        %1142 = vmatprep.subr.mxu0 0.0
        %1143 = vmatpush1.msra.mxu0 0.0
        %1144 = vmatprep.subr.mxu0 0.0
        %1145 = vmatpush1.msra.mxu0 0.0
        %1146 = vmatprep.subr.mxu0 0.0
        %1147 = vmatpush1.msra.mxu0 0.0
        %1148 = vmatprep.subr.mxu0 0.0
        %1149 = vmatpush1.msra.mxu0 0.0
        %1150 = vmatprep.subr.mxu0 0.0
        %1151 = vmatpush1.msra.mxu0 0.0
        %1152 = vmatprep.subr.mxu0 0.0
        %1153 = vmatpush1.msra.mxu0 0.0
        %1154 = vmatprep.subr.mxu0 0.0
        %1155 = vmatpush1.msra.mxu0 0.0
        %1156 = vmatprep.mubr.f32.mxu0 0.0
        %1157 = vmatmul.mubr.f32.gmra.mrb[0].mxu0 %v1084
        %v1158 = vpop.f32.mrb[0].mxu0
        %v1159 = vadd.f32 0.0, %v1158
        %v1160 = vpop.f32.mrb[0].mxu0
        %v1161 = vadd.f32 0.0, %v1160
        %1162 = vdwg.mxu0
        %v1163 = vadd.f32 %v1079, %v1159
        %v1164 = vadd.f32 %v1080, %v1161
        %s1165 = scalar_lea.vmem %s2, 56
        %v1166 = vld [vmem:[%s1165] sm:$0xff]
        %v1168 = vsel %vm583, %v1166, 0
        %v1171 = vsel %vm587, %v558, 0
        %v1174 = vsel %vm587, %v559, 0
        %1176 = vmatprep.subr.mxu0 %v1174
        %1177 = vmatpush1.msra.mxu0 %v1171
        %1178 = vmatprep.subr.mxu0 0.0
        %1179 = vmatpush1.msra.mxu0 0.0
        %1180 = vmatprep.subr.mxu0 0.0
        %1181 = vmatpush1.msra.mxu0 0.0
        %1182 = vmatprep.subr.mxu0 0.0
        %1183 = vmatpush1.msra.mxu0 0.0
        %1184 = vmatprep.subr.mxu0 0.0
        %1185 = vmatpush1.msra.mxu0 0.0
        %1186 = vmatprep.subr.mxu0 0.0
        %1187 = vmatpush1.msra.mxu0 0.0
        %1188 = vmatprep.subr.mxu0 0.0
        %1189 = vmatpush1.msra.mxu0 0.0
        %1190 = vmatprep.subr.mxu0 0.0
        %1191 = vmatpush1.msra.mxu0 0.0
        %1192 = vmatprep.subr.mxu0 0.0
        %1193 = vmatpush1.msra.mxu0 0.0
        %1194 = vmatprep.subr.mxu0 0.0
        %1195 = vmatpush1.msra.mxu0 0.0
        %1196 = vmatprep.subr.mxu0 0.0
        %1197 = vmatpush1.msra.mxu0 0.0
        %1198 = vmatprep.subr.mxu0 0.0
        %1199 = vmatpush1.msra.mxu0 0.0
        %1200 = vmatprep.subr.mxu0 0.0
        %1201 = vmatpush1.msra.mxu0 0.0
        %1202 = vmatprep.subr.mxu0 0.0
        %1203 = vmatpush1.msra.mxu0 0.0
        %1204 = vmatprep.subr.mxu0 0.0
        %1205 = vmatpush1.msra.mxu0 0.0
        %1206 = vmatprep.subr.mxu0 0.0
        %1207 = vmatpush1.msra.mxu0 0.0
        %1208 = vmatprep.subr.mxu0 0.0
        %1209 = vmatpush1.msra.mxu0 0.0
        %1210 = vmatprep.subr.mxu0 0.0
        %1211 = vmatpush1.msra.mxu0 0.0
        %1212 = vmatprep.subr.mxu0 0.0
        %1213 = vmatpush1.msra.mxu0 0.0
        %1214 = vmatprep.subr.mxu0 0.0
        %1215 = vmatpush1.msra.mxu0 0.0
        %1216 = vmatprep.subr.mxu0 0.0
        %1217 = vmatpush1.msra.mxu0 0.0
        %1218 = vmatprep.subr.mxu0 0.0
        %1219 = vmatpush1.msra.mxu0 0.0
        %1220 = vmatprep.subr.mxu0 0.0
        %1221 = vmatpush1.msra.mxu0 0.0
        %1222 = vmatprep.subr.mxu0 0.0
        %1223 = vmatpush1.msra.mxu0 0.0
        %1224 = vmatprep.subr.mxu0 0.0
        %1225 = vmatpush1.msra.mxu0 0.0
        %1226 = vmatprep.subr.mxu0 0.0
        %1227 = vmatpush1.msra.mxu0 0.0
        %1228 = vmatprep.subr.mxu0 0.0
        %1229 = vmatpush1.msra.mxu0 0.0
        %1230 = vmatprep.subr.mxu0 0.0
        %1231 = vmatpush1.msra.mxu0 0.0
        %1232 = vmatprep.subr.mxu0 0.0
        %1233 = vmatpush1.msra.mxu0 0.0
        %1234 = vmatprep.subr.mxu0 0.0
        %1235 = vmatpush1.msra.mxu0 0.0
        %1236 = vmatprep.subr.mxu0 0.0
        %1237 = vmatpush1.msra.mxu0 0.0
        %1238 = vmatprep.subr.mxu0 0.0
        %1239 = vmatpush1.msra.mxu0 0.0
        %1240 = vmatprep.mubr.f32.mxu0 0.0
        %1241 = vmatmul.mubr.f32.gmra.mrb[0].mxu0 %v1168
        %v1242 = vpop.f32.mrb[0].mxu0
        %v1243 = vadd.f32 0.0, %v1242
        %v1244 = vpop.f32.mrb[0].mxu0
        %v1245 = vadd.f32 0.0, %v1244
        %1246 = vdwg.mxu0
        %v1247 = vadd.f32 %v1163, %v1243
        %v1248 = vadd.f32 %v1164, %v1245
        %s1249 = scalar_lea.vmem %s2, 64
        %v1250 = vld [vmem:[%s1249] sm:$0xff]
        %v1252 = vsel %vm583, %v1250, 0
        %v1255 = vsel %vm587, %v578, 0
        %v1258 = vsel %vm587, %v579, 0
        %1260 = vmatprep.subr.mxu0 %v1258
        %1261 = vmatpush1.msra.mxu0 %v1255
        %1262 = vmatprep.subr.mxu0 0.0
        %1263 = vmatpush1.msra.mxu0 0.0
        %1264 = vmatprep.subr.mxu0 0.0
        %1265 = vmatpush1.msra.mxu0 0.0
        %1266 = vmatprep.subr.mxu0 0.0
        %1267 = vmatpush1.msra.mxu0 0.0
        %1268 = vmatprep.subr.mxu0 0.0
        %1269 = vmatpush1.msra.mxu0 0.0
        %1270 = vmatprep.subr.mxu0 0.0
        %1271 = vmatpush1.msra.mxu0 0.0
        %1272 = vmatprep.subr.mxu0 0.0
        %1273 = vmatpush1.msra.mxu0 0.0
        %1274 = vmatprep.subr.mxu0 0.0
        %1275 = vmatpush1.msra.mxu0 0.0
        %1276 = vmatprep.subr.mxu0 0.0
        %1277 = vmatpush1.msra.mxu0 0.0
        %1278 = vmatprep.subr.mxu0 0.0
        %1279 = vmatpush1.msra.mxu0 0.0
        %1280 = vmatprep.subr.mxu0 0.0
        %1281 = vmatpush1.msra.mxu0 0.0
        %1282 = vmatprep.subr.mxu0 0.0
        %1283 = vmatpush1.msra.mxu0 0.0
        %1284 = vmatprep.subr.mxu0 0.0
        %1285 = vmatpush1.msra.mxu0 0.0
        %1286 = vmatprep.subr.mxu0 0.0
        %1287 = vmatpush1.msra.mxu0 0.0
        %1288 = vmatprep.subr.mxu0 0.0
        %1289 = vmatpush1.msra.mxu0 0.0
        %1290 = vmatprep.subr.mxu0 0.0
        %1291 = vmatpush1.msra.mxu0 0.0
        %1292 = vmatprep.subr.mxu0 0.0
        %1293 = vmatpush1.msra.mxu0 0.0
        %1294 = vmatprep.subr.mxu0 0.0
        %1295 = vmatpush1.msra.mxu0 0.0
        %1296 = vmatprep.subr.mxu0 0.0
        %1297 = vmatpush1.msra.mxu0 0.0
        %1298 = vmatprep.subr.mxu0 0.0
        %1299 = vmatpush1.msra.mxu0 0.0
        %1300 = vmatprep.subr.mxu0 0.0
        %1301 = vmatpush1.msra.mxu0 0.0
        %1302 = vmatprep.subr.mxu0 0.0
        %1303 = vmatpush1.msra.mxu0 0.0
        %1304 = vmatprep.subr.mxu0 0.0
        %1305 = vmatpush1.msra.mxu0 0.0
        %1306 = vmatprep.subr.mxu0 0.0
        %1307 = vmatpush1.msra.mxu0 0.0
        %1308 = vmatprep.subr.mxu0 0.0
        %1309 = vmatpush1.msra.mxu0 0.0
        %1310 = vmatprep.subr.mxu0 0.0
        %1311 = vmatpush1.msra.mxu0 0.0
        %1312 = vmatprep.subr.mxu0 0.0
        %1313 = vmatpush1.msra.mxu0 0.0
        %1314 = vmatprep.subr.mxu0 0.0
        %1315 = vmatpush1.msra.mxu0 0.0
        %1316 = vmatprep.subr.mxu0 0.0
        %1317 = vmatpush1.msra.mxu0 0.0
        %1318 = vmatprep.subr.mxu0 0.0
        %1319 = vmatpush1.msra.mxu0 0.0
        %1320 = vmatprep.subr.mxu0 0.0
        %1321 = vmatpush1.msra.mxu0 0.0
        %1322 = vmatprep.subr.mxu0 0.0
        %1323 = vmatpush1.msra.mxu0 0.0
        %1324 = vmatprep.mubr.f32.mxu0 0.0
        %1325 = vmatmul.mubr.f32.gmra.mrb[0].mxu0 %v1252
        %v1326 = vpop.f32.mrb[0].mxu0
        %v1327 = vadd.f32 0.0, %v1326
        %v1328 = vpop.f32.mrb[0].mxu0
        %v1329 = vadd.f32 0.0, %v1328
        %1330 = vdwg.mxu0
        %v1331 = vadd.f32 %v1247, %v1327
        %v1332 = vadd.f32 %v1248, %v1329
        %v1333 = vld [vmem:[%s3] sm:$0xff]
        %1335 = vset.pattern.permute.xlu0 0
        %1336 = vperm.xlu0 %1335, %v1333
        %v1337 = vpop.permute.xlu0 %1336
        %v1339 = vadd.f32 %v1331, %v1337
        %v1340 = vadd.f32 %v1332, %v1337
        %v1341 = vld [vmem:[%s4] sm:$0xff]
        %vm1342 = vcmp.gt.f32.partialorder %v1339, 0.0
        %vm1343 = vcmp.gt.f32.partialorder %v1340, 0.0
        %1345 = vset.pattern.permute.xlu0 0
        %1346 = vperm.xlu0 %1345, %v1341
        %v1347 = vpop.permute.xlu0 %1346
        %v1349 = vmul.f32 %v1347, %v1339
        %v1350 = vmul.f32 %v1347, %v1340
        %v1351 = vsel %vm1342, %v1339, %v1349
        %v1352 = vsel %vm1343, %v1340, %v1350
        %1353 = vst [vmem:[%s379] sm:$0xff] %v1351
        %1354 = vst [vmem:[%s379 + $0x8] sm:$0xff] %v1352
        %1355 = vrot.lane.b32.xlu0 %v1351, 17
        %v1356 = vpop.permute.xlu0 %1355
        %1357 = vrot.lane.b32.xlu0 %v1352, 17
        %v1358 = vpop.permute.xlu0 %1357
        %v1359 = vsel %vm412, %v1356, %v1358
        %v1360 = vsel %vm412, %v1358, %v1356
        %v1361 = vmul.f32 %v1360, %v419
        %v1362 = vmul.f32 %v1359, %v423
        %1363 = vrot.lane.b32.xlu0 %v1351, 16
        %v1364 = vpop.permute.xlu0 %1363
        %1365 = vrot.lane.b32.xlu0 %v1352, 16
        %v1366 = vpop.permute.xlu0 %1365
        %v1367 = vsel %vm432, %v1364, %v1366
        %v1368 = vsel %vm432, %v1366, %v1364
        %v1369 = vmul.f32 %v1368, %v439
        %v1370 = vmul.f32 %v1367, %v443
        %1371 = vrot.lane.b32.xlu0 %v1351, 15
        %v1372 = vpop.permute.xlu0 %1371
        %1373 = vrot.lane.b32.xlu0 %v1352, 15
        %v1374 = vpop.permute.xlu0 %1373
        %v1375 = vsel %vm452, %v1372, %v1374
        %v1376 = vsel %vm452, %v1374, %v1372
        %v1377 = vmul.f32 %v1376, %v459
        %v1378 = vmul.f32 %v1375, %v463
        %1379 = vrot.lane.b32.xlu0 %v1351, 1
        %v1380 = vpop.permute.xlu0 %1379
        %1381 = vrot.lane.b32.xlu0 %v1352, 1
        %v1382 = vpop.permute.xlu0 %1381
        %v1383 = vsel %vm472, %v1380, %v1382
        %v1384 = vsel %vm472, %v1382, %v1380
        %v1385 = vmul.f32 %v1384, %v479
        %v1386 = vmul.f32 %v1383, %v483
        %v1389 = vmul.f32 %v1351, %v492
        %v1390 = vmul.f32 %v1352, %v496
        %1391 = vrot.lane.b32.xlu0 %v1351, 127
        %v1392 = vpop.permute.xlu0 %1391
        %1393 = vrot.lane.b32.xlu0 %v1352, 127
        %v1394 = vpop.permute.xlu0 %1393
        %v1395 = vsel %vm504, %v1392, %v1394
        %v1396 = vsel %vm504, %v1394, %v1392
        %v1397 = vmul.f32 %v1395, %v511
        %v1398 = vmul.f32 %v1396, %v515
        %1399 = vrot.lane.b32.xlu0 %v1351, 113
        %v1400 = vpop.permute.xlu0 %1399
        %1401 = vrot.lane.b32.xlu0 %v1352, 113
        %v1402 = vpop.permute.xlu0 %1401
        %v1403 = vsel %vm524, %v1400, %v1402
        %v1404 = vsel %vm524, %v1402, %v1400
        %v1405 = vmul.f32 %v1403, %v531
        %v1406 = vmul.f32 %v1404, %v535
        %1407 = vrot.lane.b32.xlu0 %v1351, 112
        %v1408 = vpop.permute.xlu0 %1407
        %1409 = vrot.lane.b32.xlu0 %v1352, 112
        %v1410 = vpop.permute.xlu0 %1409
        %v1411 = vsel %vm544, %v1408, %v1410
        %v1412 = vsel %vm544, %v1410, %v1408
        %v1413 = vmul.f32 %v1411, %v551
        %v1414 = vmul.f32 %v1412, %v555
        %1415 = vrot.lane.b32.xlu0 %v1351, 111
        %v1416 = vpop.permute.xlu0 %1415
        %1417 = vrot.lane.b32.xlu0 %v1352, 111
        %v1418 = vpop.permute.xlu0 %1417
        %v1419 = vsel %vm564, %v1416, %v1418
        %v1420 = vsel %vm564, %v1418, %v1416
        %v1421 = vmul.f32 %v1419, %v571
        %v1422 = vmul.f32 %v1420, %v575
        %v1423 = vld [vmem:[%s5] sm:$0xff]
        %v1424 = vld [vmem:[%s6] sm:$0xff]
        %1426 = vset.pattern.permute.xlu0 0
        %1427 = vperm.xlu0 %1426, %v1424
        %v1428 = vpop.permute.xlu0 %1427
        %vm1430 = vcmask 588800
        %v1432 = vsel %vm1430, %v1423, 0
        %1434 = vmatprep.subr.mxu0 %v1362
        %1435 = vmatpush1.msra.mxu0 %v1361
        %1436 = vmatprep.subr.mxu0 %v1370
        %1437 = vmatpush1.msra.mxu0 %v1369
        %1438 = vmatprep.subr.mxu0 %v1378
        %1439 = vmatpush1.msra.mxu0 %v1377
        %1440 = vmatprep.subr.mxu0 %v1386
        %1441 = vmatpush1.msra.mxu0 %v1385
        %1442 = vmatprep.subr.mxu0 %v1390
        %1443 = vmatpush1.msra.mxu0 %v1389
        %1444 = vmatprep.subr.mxu0 %v1398
        %1445 = vmatpush1.msra.mxu0 %v1397
        %1446 = vmatprep.subr.mxu0 %v1406
        %1447 = vmatpush1.msra.mxu0 %v1405
        %1448 = vmatprep.subr.mxu0 %v1414
        %1449 = vmatpush1.msra.mxu0 %v1413
        %1450 = vmatprep.subr.mxu0 %v1422
        %1451 = vmatpush1.msra.mxu0 %v1421
        %1452 = vmatprep.subr.mxu0 0.0
        %1453 = vmatpush1.msra.mxu0 0.0
        %1454 = vmatprep.subr.mxu0 0.0
        %1455 = vmatpush1.msra.mxu0 0.0
        %1456 = vmatprep.subr.mxu0 0.0
        %1457 = vmatpush1.msra.mxu0 0.0
        %1458 = vmatprep.subr.mxu0 0.0
        %1459 = vmatpush1.msra.mxu0 0.0
        %1460 = vmatprep.subr.mxu0 0.0
        %1461 = vmatpush1.msra.mxu0 0.0
        %1462 = vmatprep.subr.mxu0 0.0
        %1463 = vmatpush1.msra.mxu0 0.0
        %1464 = vmatprep.subr.mxu0 0.0
        %1465 = vmatpush1.msra.mxu0 0.0
        %1466 = vmatprep.subr.mxu0 0.0
        %1467 = vmatpush1.msra.mxu0 0.0
        %1468 = vmatprep.subr.mxu0 0.0
        %1469 = vmatpush1.msra.mxu0 0.0
        %1470 = vmatprep.subr.mxu0 0.0
        %1471 = vmatpush1.msra.mxu0 0.0
        %1472 = vmatprep.subr.mxu0 0.0
        %1473 = vmatpush1.msra.mxu0 0.0
        %1474 = vmatprep.subr.mxu0 0.0
        %1475 = vmatpush1.msra.mxu0 0.0
        %1476 = vmatprep.subr.mxu0 0.0
        %1477 = vmatpush1.msra.mxu0 0.0
        %1478 = vmatprep.subr.mxu0 0.0
        %1479 = vmatpush1.msra.mxu0 0.0
        %1480 = vmatprep.subr.mxu0 0.0
        %1481 = vmatpush1.msra.mxu0 0.0
        %1482 = vmatprep.subr.mxu0 0.0
        %1483 = vmatpush1.msra.mxu0 0.0
        %1484 = vmatprep.subr.mxu0 0.0
        %1485 = vmatpush1.msra.mxu0 0.0
        %1486 = vmatprep.subr.mxu0 0.0
        %1487 = vmatpush1.msra.mxu0 0.0
        %1488 = vmatprep.subr.mxu0 0.0
        %1489 = vmatpush1.msra.mxu0 0.0
        %1490 = vmatprep.subr.mxu0 0.0
        %1491 = vmatpush1.msra.mxu0 0.0
        %1492 = vmatprep.subr.mxu0 0.0
        %1493 = vmatpush1.msra.mxu0 0.0
        %1494 = vmatprep.subr.mxu0 0.0
        %1495 = vmatpush1.msra.mxu0 0.0
        %1496 = vmatprep.subr.mxu0 0.0
        %1497 = vmatpush1.msra.mxu0 0.0
        %1498 = vmatprep.mubr.f32.mxu0 0.0
        %1499 = vmatmul.mubr.f32.gmra.mrb[0].mxu0 %v1432
        %v1500 = vpop.f32.mrb[0].mxu0
        %v1501 = vadd.f32 %v1428, %v1500
        %v1502 = vpop.f32.mrb[0].mxu0
        %v1503 = vadd.f32 %v1428, %v1502
        %1504 = vdwg.mxu0
        %v1505 = vld [vmem:[%s7] sm:$0xff]
        %vm1506 = vcmp.gt.f32.partialorder %v1501, 0.0
        %vm1507 = vcmp.gt.f32.partialorder %v1503, 0.0
        %1509 = vset.pattern.permute.xlu0 0
        %1510 = vperm.xlu0 %1509, %v1505
        %v1511 = vpop.permute.xlu0 %1510
        %v1513 = vmul.f32 %v1511, %v1501
        %v1514 = vmul.f32 %v1511, %v1503
        %v1515 = vsel %vm1506, %v1501, %v1513
        %v1516 = vsel %vm1507, %v1503, %v1514
        %1517 = vst [vmem:[%s379 + $0x10] sm:$0xff] %v1515
        %1518 = vst [vmem:[%s379 + $0x18] sm:$0xff] %v1516
        %1519 = vrot.lane.b32.xlu0 %v1515, 17
        %v1520 = vpop.permute.xlu0 %1519
        %1521 = vrot.lane.b32.xlu0 %v1516, 17
        %v1522 = vpop.permute.xlu0 %1521
        %v1523 = vsel %vm412, %v1520, %v1522
        %v1524 = vsel %vm412, %v1522, %v1520
        %v1525 = vmul.f32 %v1524, %v419
        %v1526 = vmul.f32 %v1523, %v423
        %1527 = vrot.lane.b32.xlu0 %v1515, 16
        %v1528 = vpop.permute.xlu0 %1527
        %1529 = vrot.lane.b32.xlu0 %v1516, 16
        %v1530 = vpop.permute.xlu0 %1529
        %v1531 = vsel %vm432, %v1528, %v1530
        %v1532 = vsel %vm432, %v1530, %v1528
        %v1533 = vmul.f32 %v1532, %v439
        %v1534 = vmul.f32 %v1531, %v443
        %1535 = vrot.lane.b32.xlu0 %v1515, 15
        %v1536 = vpop.permute.xlu0 %1535
        %1537 = vrot.lane.b32.xlu0 %v1516, 15
        %v1538 = vpop.permute.xlu0 %1537
        %v1539 = vsel %vm452, %v1536, %v1538
        %v1540 = vsel %vm452, %v1538, %v1536
        %v1541 = vmul.f32 %v1540, %v459
        %v1542 = vmul.f32 %v1539, %v463
        %1543 = vrot.lane.b32.xlu0 %v1515, 1
        %v1544 = vpop.permute.xlu0 %1543
        %1545 = vrot.lane.b32.xlu0 %v1516, 1
        %v1546 = vpop.permute.xlu0 %1545
        %v1547 = vsel %vm472, %v1544, %v1546
        %v1548 = vsel %vm472, %v1546, %v1544
        %v1549 = vmul.f32 %v1548, %v479
        %v1550 = vmul.f32 %v1547, %v483
        %v1551 = vmul.f32 %v1515, %v492
        %v1552 = vmul.f32 %v1516, %v496
        %1553 = vrot.lane.b32.xlu0 %v1515, 127
        %v1554 = vpop.permute.xlu0 %1553
        %1555 = vrot.lane.b32.xlu0 %v1516, 127
        %v1556 = vpop.permute.xlu0 %1555
        %v1557 = vsel %vm504, %v1554, %v1556
        %v1558 = vsel %vm504, %v1556, %v1554
        %v1559 = vmul.f32 %v1557, %v511
        %v1560 = vmul.f32 %v1558, %v515
        %1561 = vrot.lane.b32.xlu0 %v1515, 113
        %v1562 = vpop.permute.xlu0 %1561
        %1563 = vrot.lane.b32.xlu0 %v1516, 113
        %v1564 = vpop.permute.xlu0 %1563
        %v1565 = vsel %vm524, %v1562, %v1564
        %v1566 = vsel %vm524, %v1564, %v1562
        %v1567 = vmul.f32 %v1565, %v531
        %v1568 = vmul.f32 %v1566, %v535
        %1569 = vrot.lane.b32.xlu0 %v1515, 112
        %v1570 = vpop.permute.xlu0 %1569
        %1571 = vrot.lane.b32.xlu0 %v1516, 112
        %v1572 = vpop.permute.xlu0 %1571
        %v1573 = vsel %vm544, %v1570, %v1572
        %v1574 = vsel %vm544, %v1572, %v1570
        %v1575 = vmul.f32 %v1573, %v551
        %v1576 = vmul.f32 %v1574, %v555
        %1577 = vrot.lane.b32.xlu0 %v1515, 111
        %v1578 = vpop.permute.xlu0 %1577
        %1579 = vrot.lane.b32.xlu0 %v1516, 111
        %v1580 = vpop.permute.xlu0 %1579
        %v1581 = vsel %vm564, %v1578, %v1580
        %v1582 = vsel %vm564, %v1580, %v1578
        %v1583 = vmul.f32 %v1581, %v571
        %v1584 = vmul.f32 %v1582, %v575
        %v1585 = vld [vmem:[%s8] sm:$0xff]
        %v1586 = vld [vmem:[%s9] sm:$0xff]
        %1588 = vset.pattern.permute.xlu0 0
        %1589 = vperm.xlu0 %1588, %v1586
        %v1590 = vpop.permute.xlu0 %1589
        %v1593 = vsel %vm1430, %v1585, 0
        %1595 = vmatprep.subr.mxu0 %v1526
        %1596 = vmatpush1.msra.mxu0 %v1525
        %1597 = vmatprep.subr.mxu0 %v1534
        %1598 = vmatpush1.msra.mxu0 %v1533
        %1599 = vmatprep.subr.mxu0 %v1542
        %1600 = vmatpush1.msra.mxu0 %v1541
        %1601 = vmatprep.subr.mxu0 %v1550
        %1602 = vmatpush1.msra.mxu0 %v1549
        %1603 = vmatprep.subr.mxu0 %v1552
        %1604 = vmatpush1.msra.mxu0 %v1551
        %1605 = vmatprep.subr.mxu0 %v1560
        %1606 = vmatpush1.msra.mxu0 %v1559
        %1607 = vmatprep.subr.mxu0 %v1568
        %1608 = vmatpush1.msra.mxu0 %v1567
        %1609 = vmatprep.subr.mxu0 %v1576
        %1610 = vmatpush1.msra.mxu0 %v1575
        %1611 = vmatprep.subr.mxu0 %v1584
        %1612 = vmatpush1.msra.mxu0 %v1583
        %1613 = vmatprep.subr.mxu0 0.0
        %1614 = vmatpush1.msra.mxu0 0.0
        %1615 = vmatprep.subr.mxu0 0.0
        %1616 = vmatpush1.msra.mxu0 0.0
        %1617 = vmatprep.subr.mxu0 0.0
        %1618 = vmatpush1.msra.mxu0 0.0
        %1619 = vmatprep.subr.mxu0 0.0
        %1620 = vmatpush1.msra.mxu0 0.0
        %1621 = vmatprep.subr.mxu0 0.0
        %1622 = vmatpush1.msra.mxu0 0.0
        %1623 = vmatprep.subr.mxu0 0.0
        %1624 = vmatpush1.msra.mxu0 0.0
        %1625 = vmatprep.subr.mxu0 0.0
        %1626 = vmatpush1.msra.mxu0 0.0
        %1627 = vmatprep.subr.mxu0 0.0
        %1628 = vmatpush1.msra.mxu0 0.0
        %1629 = vmatprep.subr.mxu0 0.0
        %1630 = vmatpush1.msra.mxu0 0.0
        %1631 = vmatprep.subr.mxu0 0.0
        %1632 = vmatpush1.msra.mxu0 0.0
        %1633 = vmatprep.subr.mxu0 0.0
        %1634 = vmatpush1.msra.mxu0 0.0
        %1635 = vmatprep.subr.mxu0 0.0
        %1636 = vmatpush1.msra.mxu0 0.0
        %1637 = vmatprep.subr.mxu0 0.0
        %1638 = vmatpush1.msra.mxu0 0.0
        %1639 = vmatprep.subr.mxu0 0.0
        %1640 = vmatpush1.msra.mxu0 0.0
        %1641 = vmatprep.subr.mxu0 0.0
        %1642 = vmatpush1.msra.mxu0 0.0
        %1643 = vmatprep.subr.mxu0 0.0
        %1644 = vmatpush1.msra.mxu0 0.0
        %1645 = vmatprep.subr.mxu0 0.0
        %1646 = vmatpush1.msra.mxu0 0.0
        %1647 = vmatprep.subr.mxu0 0.0
        %1648 = vmatpush1.msra.mxu0 0.0
        %1649 = vmatprep.subr.mxu0 0.0
        %1650 = vmatpush1.msra.mxu0 0.0
        %1651 = vmatprep.subr.mxu0 0.0
        %1652 = vmatpush1.msra.mxu0 0.0
        %1653 = vmatprep.subr.mxu0 0.0
        %1654 = vmatpush1.msra.mxu0 0.0
        %1655 = vmatprep.subr.mxu0 0.0
        %1656 = vmatpush1.msra.mxu0 0.0
        %1657 = vmatprep.subr.mxu0 0.0
        %1658 = vmatpush1.msra.mxu0 0.0
        %1659 = vmatprep.mubr.f32.mxu0 0.0
        %1660 = vmatmul.mubr.f32.gmra.mrb[0].mxu0 %v1593
        %v1661 = vpop.f32.mrb[0].mxu0
        %v1662 = vadd.f32 %v1590, %v1661
        %v1663 = vpop.f32.mrb[0].mxu0
        %v1664 = vadd.f32 %v1590, %v1663
        %1665 = vdwg.mxu0
        %v1666 = vld [vmem:[%s10] sm:$0xff]
        %vm1667 = vcmp.gt.f32.partialorder %v1662, 0.0
        %vm1668 = vcmp.gt.f32.partialorder %v1664, 0.0
        %1670 = vset.pattern.permute.xlu0 0
        %1671 = vperm.xlu0 %1670, %v1666
        %v1672 = vpop.permute.xlu0 %1671
        %v1674 = vmul.f32 %v1672, %v1662
        %v1675 = vmul.f32 %v1672, %v1664
        %v1676 = vsel %vm1667, %v1662, %v1674
        %v1677 = vsel %vm1668, %v1664, %v1675
        %1678 = vst [vmem:[%s379 + $0x20] sm:$0xff] %v1676
        %1679 = vst [vmem:[%s379 + $0x28] sm:$0xff] %v1677
        %s1680 = sand.u32 %s269, 1
        %s1681 = scalar_lea.sflag [#allocation3], %s1680
        %s1682 = sand.u32 %s269, 1
        %s1683 = smul.addr %s1682, 48
        %s1684 = scalar_lea.vmem [#allocation2], %s1683
        // Predicated region
        $region65: #{tpu_custom_call.1} parent=63 // pred_check
          %p1685 = pneg %p279
        $region66: #{tpu_custom_call.1} parent=63 // pred_check_branch
          %1687 = sbr.rel (%p1685) target = $region68
        $region67: #{tpu_custom_call.1} parent=63 // pred_region
          %s1689 = ssub.s32 768, 768
          %1690 = vsyncadd %s1681, %s1689
          %s1691 = smul.addr %s25, 6
          %s1692 = smul.addr %s1691, 128
          %s1693 = scalar_lea.hbm %s11, %s1692
          %s1694 = sshll.u32 %s1684, 4
          %s1695 = int_to_ptr.vmem [resolvable:$true] %s1694
          %1700 = dma.vmem_to_hbm [thread:$0]  %s1695, 768, %s1693, %s1681, 256, 256, 16
        $region68: #{tpu_custom_call.1} parent=63 // pred_fallthru
          _
      $region64: #{tpu_custom_call.1} parent=5 // pred_fallthru
        _
      %p1701 = scmp.le.s32.totalorder 2, %s20
      // Predicated region
      $region69: #{tpu_custom_call.1} parent=5 // pred_check
        %p1702 = pneg %p1701
      $region70: #{tpu_custom_call.1} parent=5 // pred_check_branch
        %1704 = sbr.rel (%p1702) target = $region72
      $region71: #{tpu_custom_call.1} parent=5 // pred_region
        %s1705 = ssub.s32 %s20, 2
        // Predicated region
        $region73: #{tpu_custom_call.1} parent=71 // pred_check
          %p1706 = pneg %p285
        $region74: #{tpu_custom_call.1} parent=71 // pred_check_branch
          %1708 = sbr.rel (%p1706) target = $region76
        $region75: #{tpu_custom_call.1} parent=71 // pred_region
          %s1709 = sand.u32 %s270, 1
          %s1710 = scalar_lea.sflag [#allocation3], %s1709
          %s1711 = sand.u32 %s270, 1
          %s1712 = smul.addr %s1711, 48
          %s1713 = scalar_lea.vmem [#allocation2], %s1712
          %1714 = dma.done %s1710, 768
        $region76: #{tpu_custom_call.1} parent=71 // pred_fallthru
          _
      $region72: #{tpu_custom_call.1} parent=5 // pred_fallthru
        _
    $region6: #{tpu_custom_call.1} parent=1 // loop_footer
      %s24 = sadd.s32 1, %s20
    $region7: #{tpu_custom_call.1} parent=1 // loop_footer_branch
      %19 = sbr.rel target = $region3
    $region8: #{tpu_custom_call.1} parent=1 // loop_exit
      _
    %1715 = vsyncpa [#allocation3], 1
    %s1716 = scalar_lea.sflag [#allocation3], 1
    %1717 = vsyncpa %s1716, 1

</llo_original>
